<compile_context>
chip_gen: v6e
topology: v6e:2x2x1
jax: 0.10.0
libtpu: 0.0.40
codegen_flags: <defaults>
</compile_context>

<pallas_src>
import functools
import math

import jax
import jax.numpy as jnp
from jax.experimental import pallas as pl
from jax.experimental.pallas import tpu as pltpu

LEAK = 0.1                    # LeakyReLU negative slope used throughout
BN_EPS = 1e-5                 # nn.BatchNorm1d default eps
MXU_DTYPE = jnp.bfloat16      # matmul-operand dtype (jnp.float32 => exact parity)


def _leaky_relu(x):
    return jnp.where(x > 0, x, LEAK * x)


def _round_up(n, m):
    return -(-n // m) * m


# --------------------------------------------------------------------------
# The single fused forward kernel (one batch tile per grid step).
# --------------------------------------------------------------------------
def _fused_forward_kernel(x_ref, w_ref, b_ref, o_ref, *, cfg):
    TB, T, k = cfg['TB'], cfg['T'], cfg['ksize']
    woff, boff = cfg['woff'], cfg['boff']

    def W(name):                                  # (rows, cols) slice of weight slab
        r, nr, nc = woff[name]
        return w_ref[pl.ds(r, nr), pl.ds(0, nc)]

    def Bv(name):                                 # (1, cols) bias / scalar row
        r, nr, nc = boff[name]
        return b_ref[pl.ds(r, nr), pl.ds(0, nc)]

    def mm(a, name):                              # bf16 MXU operands, f32 accumulate
        w = W(name)
        return jnp.dot(a.astype(w.dtype), w, preferred_element_type=jnp.float32)

    def causal_conv_lrelu(xin, wname, bname, dil, cin, cout):
        # causal left zero-pad once, then k accumulated per-tap GEMMs
        pad = (k - 1) * dil
        xp = (jnp.concatenate([jnp.zeros((TB, pad, cin), xin.dtype), xin], axis=1)
              if pad else xin)
        acc = None
        for j in range(k):
            xs = xp[:, j * dil: j * dil + T, :].reshape(TB * T, cin)
            part = mm(xs, f'{wname}_{j}')
            acc = part if acc is None else acc + part
        return _leaky_relu(acc + Bv(bname)).reshape(TB, T, cout)

    # ---------------- TemporalBlocks ----------------
    x = x_ref[...].astype(jnp.float32)            # (TB, T, Cin0), channels-last
    cin = cfg['num_inputs']
    for bi, (dil, cout, has_down) in enumerate(cfg['blocks']):
        h = causal_conv_lrelu(x, f'b{bi}_w1', f'b{bi}_b1', dil, cin, cout)
        h = causal_conv_lrelu(h, f'b{bi}_w2', f'b{bi}_b2', dil, cout, cout)
        if has_down:                              # 1x1 downsample conv
            res = mm(x.reshape(TB * T, cin), f'b{bi}_wd') + Bv(f'b{bi}_bd')
        else:                                     # identity residual
            res = x.reshape(TB * T, cout)
        x = _leaky_relu(h.reshape(TB * T, cout) + res).reshape(TB, T, cout)
        cin = cout

    # ---------------- Self-attention (last query timestep only) -------------
    C, Cq = cfg['C'], cfg['Cq']
    x2 = x.reshape(TB * T, C)
    vk = mm(x2, 'wvk') + Bv('bvk')                # (TB*T, C + Cq); V first => lane-aligned
    V = vk[:, :C].reshape(TB, T, C)
    K = vk[:, C:].reshape(TB, T, Cq)
    x_last = x[:, T - 1, :]                       # (TB, C)
    q_last = mm(x_last, 'wq') + Bv('bq')          # (TB, Cq)
    energy = jnp.sum(q_last[:, None, :] * K, axis=-1)          # (TB, T)
    m = jnp.max(energy, axis=-1, keepdims=True)
    e = jnp.exp(energy - m)
    att = e / jnp.sum(e, axis=-1, keepdims=True)                # exact softmax
    ctx = jnp.sum(att[:, :, None] * V, axis=1)                  # (TB, C)
    feats = Bv('gamma') * ctx + x_last                          # gamma residual

    # ---------------- FC head (eval-mode BN folded into Linears) ------------
    h = feats
    for li in range(4):
        h = mm(h, f'fc{li}') + Bv(f'fcb{li}')
        if li < 3:
            h = _leaky_relu(h)
    o_ref[...] = h                                              # (TB, 1)


# --------------------------------------------------------------------------
# Parameter init (deterministic, matching the module's shapes)
# --------------------------------------------------------------------------
def _kaiming_normal(key, shape, fan_in, a=LEAK):
    gain = math.sqrt(2.0 / (1.0 + a * a))
    return (gain / math.sqrt(fan_in)) * jax.random.normal(key, shape, jnp.float32)


def _uniform(key, shape, bound):
    return jax.random.uniform(key, shape, jnp.float32, -bound, bound)


def init_params(key, num_inputs, num_channels, kernel_size=3):
    params = {'blocks': []}
    for i, cout in enumerate(num_channels):
        cin = num_inputs if i == 0 else num_channels[i - 1]
        key, k1, k2, k3, k4, k5, k6 = jax.random.split(key, 7)
        blk = {
            'dilation': 2 ** i,
            # stored as (k, Cin, Cout); PyTorch layout is (Cout, Cin, k)
            'w1': _kaiming_normal(k1, (kernel_size, cin, cout), cin * kernel_size),
            'b1': _uniform(k2, (cout,), 1.0 / math.sqrt(cin * kernel_size)),
            'w2': _kaiming_normal(k3, (kernel_size, cout, cout), cout * kernel_size),
            'b2': _uniform(k4, (cout,), 1.0 / math.sqrt(cout * kernel_size)),
        }
        if cin != cout:                           # downsample 1x1 conv
            blk['wd'] = _kaiming_normal(k5, (cin, cout), cin)
            blk['bd'] = _uniform(k6, (cout,), 1.0 / math.sqrt(cin))
        params['blocks'].append(blk)

    C = num_channels[-1]
    Cq = C // 8
    key, kq, kqb, kk, kkb, kv, kvb = jax.random.split(key, 7)
    params['attn'] = {
        'wq': _uniform(kq, (C, Cq), 1.0 / math.sqrt(C)),
        'bq': _uniform(kqb, (Cq,), 1.0 / math.sqrt(C)),
        'wk': _uniform(kk, (C, Cq), 1.0 / math.sqrt(C)),
        'bk': _uniform(kkb, (Cq,), 1.0 / math.sqrt(C)),
        'wv': _uniform(kv, (C, C), 1.0 / math.sqrt(C)),
        'bv': _uniform(kvb, (C,), 1.0 / math.sqrt(C)),
        'gamma': jnp.zeros((1, 1), jnp.float32),  # nn.Parameter(torch.zeros(1))
    }

    def bn_params(c):  # rows: gamma=1, beta=0, running_mean=0, running_var=1
        return jnp.concatenate(
            [jnp.ones((1, c)), jnp.zeros((1, c)), jnp.zeros((1, c)), jnp.ones((1, c))],
            axis=0).astype(jnp.float32)

    dims = [C, 128, 64, 32, 1]
    fc = {'bns': [bn_params(C), bn_params(128), bn_params(64)], 'ws': [], 'bs': []}
    for din, dout in zip(dims[:-1], dims[1:]):
        key, kw, kb = jax.random.split(key, 3)
        fc['ws'].append(_uniform(kw, (din, dout), 1.0 / math.sqrt(din)))
        fc['bs'].append(_uniform(kb, (dout,), 1.0 / math.sqrt(din)))
    params['fc'] = fc
    return params


# --------------------------------------------------------------------------
# One-time parameter packing: 1 weight slab (bf16) + 1 bias/scalar slab (f32)
# --------------------------------------------------------------------------
def _pack_slab(entries, dtype, row_align):
    width = _round_up(max(a.shape[1] for _, a in entries), 128)
    pieces, offsets, cur = [], {}, 0
    for name, arr in entries:
        arr = jnp.asarray(arr, jnp.float32)
        r, c = arr.shape
        gap = (-cur) % row_align
        if gap:
            pieces.append(jnp.zeros((gap, width), jnp.float32))
            cur += gap
        pieces.append(jnp.pad(arr, ((0, 0), (0, width - c))))
        offsets[name] = (cur, r, c)
        cur += r
    tail = (-cur) % 8
    if tail:
        pieces.append(jnp.zeros((tail, width), jnp.float32))
        cur += tail
    return jnp.concatenate(pieces, axis=0).astype(dtype), offsets


def prepare_fused(params, num_inputs, kernel_size):
    k = kernel_size
    w_entries, b_entries, blocks_cfg = [], [], []
    cin = num_inputs
    for i, blk in enumerate(params['blocks']):
        cout = blk['w1'].shape[-1]
        has_down = 'wd' in blk
        blocks_cfg.append((blk['dilation'], cout, has_down))
        for j in range(k):                        # per-tap (Cin, Cout) weights
            w_entries.append((f'b{i}_w1_{j}', blk['w1'][j]))
            w_entries.append((f'b{i}_w2_{j}', blk['w2'][j]))
        b_entries.append((f'b{i}_b1', blk['b1'].reshape(1, -1)))
        b_entries.append((f'b{i}_b2', blk['b2'].reshape(1, -1)))
        if has_down:
            w_entries.append((f'b{i}_wd', blk['wd']))
            b_entries.append((f'b{i}_bd', blk['bd'].reshape(1, -1)))
        cin = cout

    C = cin
    ap = params['attn']
    Cq = ap['wq'].shape[-1]
    # [wv | wk] so V lands at lane offset 0 (aligned); q is projected separately
    # (only the last timestep is needed).
    w_entries.append(('wvk', jnp.concatenate([ap['wv'], ap['wk']], axis=1)))
    b_entries.append(('bvk', jnp.concatenate([ap['bv'], ap['bk']]).reshape(1, -1)))
    w_entries.append(('wq', ap['wq']))
    b_entries.append(('bq', ap['bq'].reshape(1, -1)))
    b_entries.append(('gamma', ap['gamma'].reshape(1, 1)))

    fc = params['fc']
    for i in range(4):
        w, b = fc['ws'][i], fc['bs'][i]
        if i < 3:                                 # fold eval-mode BN (exact in eval)
            bn = fc['bns'][i]
            s = bn[0] / jnp.sqrt(bn[3] + BN_EPS)
            t = bn[1] - bn[2] * s
            b = b + t @ w
            w = s[:, None] * w
        w_entries.append((f'fc{i}', w))
        b_entries.append((f'fcb{i}', b.reshape(1, -1)))

    w_slab, woff = _pack_slab(w_entries, MXU_DTYPE, row_align=8)
    b_slab, boff = _pack_slab(b_entries, jnp.float32, row_align=1)
    cfg = dict(num_inputs=num_inputs, ksize=k, blocks=tuple(blocks_cfg),
               C=C, Cq=Cq, woff=woff, boff=boff)
    return cfg, w_slab, b_slab


# --------------------------------------------------------------------------
# Forward-pass factory: one pallas_call, gridded over the batch dimension,
# compiled once per (B, T) shape via jax.jit.
# --------------------------------------------------------------------------
def make_forward(prepared):
    cfg, w_slab, b_slab = prepared

    @jax.jit
    def fwd(x_ncl, w_slab, b_slab):
        # PyTorch-style (B, num_inputs, T) -> channels-last (B, T, C)
        x = jnp.transpose(x_ncl, (0, 2, 1)).astype(jnp.float32)
        B, T, Cin = x.shape
        TB = B if B <= 8 else 8                   # batch tile per grid step
        Bp = _round_up(B, TB)
        if Bp != B:
            x = jnp.concatenate(
                [x, jnp.zeros((Bp - B, T, Cin), x.dtype)], axis=0)
        kcfg = dict(cfg, TB=TB, T=T)
        out = pl.pallas_call(
            functools.partial(_fused_forward_kernel, cfg=kcfg),
            grid=(Bp // TB,),
            in_specs=[
                pl.BlockSpec((TB, T, Cin), lambda i: (i, 0, 0)),   # per-batch tile
                pl.BlockSpec(w_slab.shape, lambda i: (0, 0)),      # resident weights
                pl.BlockSpec(b_slab.shape, lambda i: (0, 0)),      # resident biases
            ],
            out_specs=pl.BlockSpec((TB, 1), lambda i: (i, 0)),
            out_shape=jax.ShapeDtypeStruct((Bp, 1), jnp.float32),
            compiler_params=pltpu.CompilerParams(
                dimension_semantics=("parallel",),                 # v7x: 2 TCs
                vmem_limit_bytes=32 * 1024 * 1024),
        )(x, w_slab, b_slab)
        # TODO(synk): training-mode Dropout and batch-statistics BatchNorm are
        # not implemented (eval-mode semantics: dropout=identity, BN=running stats).
        return out[:B, 0]                          # .squeeze(-1)

    return lambda x_ncl: fwd(x_ncl, w_slab, b_slab)


if __name__ == "__main__":
    key = jax.random.PRNGKey(0)
    kx, kp = jax.random.split(key)
    num_inputs, num_channels, kernel_size = 4, [16, 32], 3
    B, T = 2, 16
    x = jax.random.normal(kx, (B, num_inputs, T), jnp.float32)   # PyTorch NCL input
    params = init_params(kp, num_inputs, num_channels, kernel_size)
    prepared = prepare_fused(params, num_inputs, kernel_size)
    forward = make_forward(prepared)
    y = forward(x)
    jax.block_until_ready(y)
    assert y.shape == (B,) and y.dtype == jnp.float32
    print("KERNEL_OK")
</pallas_src>

<mosaic_0001>
module attributes {stable_mosaic.version = 11 : i64} {
  func.func @_fused_forward_kernel(%arg0: i32, %arg1: memref<2x16x4xf32, #tpu.memory_space<vmem>>, %arg2: memref<560x128xbf16, #tpu.memory_space<vmem>>, %arg3: memref<16x128xf32, #tpu.memory_space<vmem>>, %arg4: memref<2x1xf32, #tpu.memory_space<vmem>>) attributes {dimension_semantics = [#tpu.dimension_semantics<parallel>], iteration_bounds = array<i64: 1>, scalar_prefetch = 0 : i64, scratch_operands = 0 : i64, tpu.core_type = #tpu.core_type<tc>, window_params = [{transform_indices = @transform_0, window_bounds = array<i64: 2, 16, 4>}, {pipeline_mode = #tpu.pipeline_mode<synchronous>, transform_indices = @transform_1, window_bounds = array<i64: 560, 128>}, {pipeline_mode = #tpu.pipeline_mode<synchronous>, transform_indices = @transform_2, window_bounds = array<i64: 16, 128>}, {transform_indices = @transform_3, window_bounds = array<i64: 2, 1>}]} {
    %c0 = arith.constant 0 : index
    %c0_0 = arith.constant 0 : index
    %c0_1 = arith.constant 0 : index
    %0 = vector.load %arg1[%c0, %c0_0, %c0_1] : memref<2x16x4xf32, #tpu.memory_space<vmem>>, vector<2x16x4xf32>
    %cst = arith.constant 0.000000e+00 : f32
    %1 = vector.broadcast %cst : f32 to vector<2x2x4xf32>
    %2 = tpu.concatenate %1, %0 in 1 : vector<2x2x4xf32>, vector<2x16x4xf32> -> vector<2x18x4xf32>
    %3 = vector.extract_strided_slice %2 {offsets = [0, 0, 0], sizes = [2, 16, 4], strides = [1, 1, 1]} : vector<2x18x4xf32> to vector<2x16x4xf32>
    %4 = vector.shape_cast %3 : vector<2x16x4xf32> to vector<32x4xf32>
    %c0_2 = arith.constant 0 : index
    %c0_3 = arith.constant 0 : index
    %5 = vector.load %arg2[%c0_2, %c0_3] : memref<560x128xbf16, #tpu.memory_space<vmem>>, vector<4x16xbf16>
    %6 = arith.truncf %4 : vector<32x4xf32> to vector<32x4xbf16>
    %cst_4 = arith.constant dense<0.000000e+00> : vector<32x16xf32>
    %7 = tpu.matmul %6, %5, %cst_4 {dimension_numbers = #tpu.dot_dimension_numbers<[1], [0], [0], [1], [0, 0, 1, 1], [], []>} : vector<32x4xbf16>, vector<4x16xbf16>, vector<32x16xf32> -> vector<32x16xf32>
    %8 = vector.extract_strided_slice %2 {offsets = [0, 1, 0], sizes = [2, 16, 4], strides = [1, 1, 1]} : vector<2x18x4xf32> to vector<2x16x4xf32>
    %9 = vector.shape_cast %8 : vector<2x16x4xf32> to vector<32x4xf32>
    %c24 = arith.constant 24 : index
    %c0_5 = arith.constant 0 : index
    %10 = vector.load %arg2[%c24, %c0_5] : memref<560x128xbf16, #tpu.memory_space<vmem>>, vector<4x16xbf16>
    %11 = arith.truncf %9 : vector<32x4xf32> to vector<32x4xbf16>
    %cst_6 = arith.constant dense<0.000000e+00> : vector<32x16xf32>
    %12 = tpu.matmul %11, %10, %cst_6 {dimension_numbers = #tpu.dot_dimension_numbers<[1], [0], [0], [1], [0, 0, 1, 1], [], []>} : vector<32x4xbf16>, vector<4x16xbf16>, vector<32x16xf32> -> vector<32x16xf32>
    %13 = arith.addf %7, %12 : vector<32x16xf32>
    %14 = vector.extract_strided_slice %2 {offsets = [0, 2, 0], sizes = [2, 16, 4], strides = [1, 1, 1]} : vector<2x18x4xf32> to vector<2x16x4xf32>
    %15 = vector.shape_cast %14 : vector<2x16x4xf32> to vector<32x4xf32>
    %c48 = arith.constant 48 : index
    %c0_7 = arith.constant 0 : index
    %16 = vector.load %arg2[%c48, %c0_7] : memref<560x128xbf16, #tpu.memory_space<vmem>>, vector<4x16xbf16>
    %17 = arith.truncf %15 : vector<32x4xf32> to vector<32x4xbf16>
    %cst_8 = arith.constant dense<0.000000e+00> : vector<32x16xf32>
    %18 = tpu.matmul %17, %16, %cst_8 {dimension_numbers = #tpu.dot_dimension_numbers<[1], [0], [0], [1], [0, 0, 1, 1], [], []>} : vector<32x4xbf16>, vector<4x16xbf16>, vector<32x16xf32> -> vector<32x16xf32>
    %19 = arith.addf %13, %18 : vector<32x16xf32>
    %c0_9 = arith.constant 0 : index
    %c0_10 = arith.constant 0 : index
    %20 = vector.load %arg3[%c0_9, %c0_10] : memref<16x128xf32, #tpu.memory_space<vmem>>, vector<1x16xf32>
    %21 = vector.broadcast %20 : vector<1x16xf32> to vector<32x16xf32>
    %22 = arith.addf %19, %21 : vector<32x16xf32>
    %cst_11 = arith.constant 0.000000e+00 : f32
    %23 = vector.broadcast %cst_11 : f32 to vector<32x16xf32>
    %24 = arith.cmpf ogt, %22, %23 : vector<32x16xf32>
    %cst_12 = arith.constant 1.000000e-01 : f32
    %25 = vector.broadcast %cst_12 : f32 to vector<32x16xf32>
    %26 = arith.mulf %25, %22 : vector<32x16xf32>
    %27 = arith.select %24, %22, %26 : vector<32x16xi1>, vector<32x16xf32>
    %28 = vector.shape_cast %27 : vector<32x16xf32> to vector<2x16x16xf32>
    %cst_13 = arith.constant 0.000000e+00 : f32
    %29 = vector.broadcast %cst_13 : f32 to vector<2x2x16xf32>
    %30 = tpu.concatenate %29, %28 in 1 : vector<2x2x16xf32>, vector<2x16x16xf32> -> vector<2x18x16xf32>
    %31 = vector.extract_strided_slice %30 {offsets = [0, 0, 0], sizes = [2, 16, 16], strides = [1, 1, 1]} : vector<2x18x16xf32> to vector<2x16x16xf32>
    %32 = vector.shape_cast %31 : vector<2x16x16xf32> to vector<32x16xf32>
    %c8 = arith.constant 8 : index
    %c0_14 = arith.constant 0 : index
    %33 = vector.load %arg2[%c8, %c0_14] : memref<560x128xbf16, #tpu.memory_space<vmem>>, vector<16x16xbf16>
    %34 = arith.truncf %32 : vector<32x16xf32> to vector<32x16xbf16>
    %cst_15 = arith.constant dense<0.000000e+00> : vector<32x16xf32>
    %35 = tpu.matmul %34, %33, %cst_15 {dimension_numbers = #tpu.dot_dimension_numbers<[1], [0], [0], [1], [0, 0, 1, 1], [], []>} : vector<32x16xbf16>, vector<16x16xbf16>, vector<32x16xf32> -> vector<32x16xf32>
    %36 = vector.extract_strided_slice %30 {offsets = [0, 1, 0], sizes = [2, 16, 16], strides = [1, 1, 1]} : vector<2x18x16xf32> to vector<2x16x16xf32>
    %37 = vector.shape_cast %36 : vector<2x16x16xf32> to vector<32x16xf32>
    %c32 = arith.constant 32 : index
    %c0_16 = arith.constant 0 : index
    %38 = vector.load %arg2[%c32, %c0_16] : memref<560x128xbf16, #tpu.memory_space<vmem>>, vector<16x16xbf16>
    %39 = arith.truncf %37 : vector<32x16xf32> to vector<32x16xbf16>
    %cst_17 = arith.constant dense<0.000000e+00> : vector<32x16xf32>
    %40 = tpu.matmul %39, %38, %cst_17 {dimension_numbers = #tpu.dot_dimension_numbers<[1], [0], [0], [1], [0, 0, 1, 1], [], []>} : vector<32x16xbf16>, vector<16x16xbf16>, vector<32x16xf32> -> vector<32x16xf32>
    %41 = arith.addf %35, %40 : vector<32x16xf32>
    %42 = vector.extract_strided_slice %30 {offsets = [0, 2, 0], sizes = [2, 16, 16], strides = [1, 1, 1]} : vector<2x18x16xf32> to vector<2x16x16xf32>
    %43 = vector.shape_cast %42 : vector<2x16x16xf32> to vector<32x16xf32>
    %c56 = arith.constant 56 : index
    %c0_18 = arith.constant 0 : index
    %44 = vector.load %arg2[%c56, %c0_18] : memref<560x128xbf16, #tpu.memory_space<vmem>>, vector<16x16xbf16>
    %45 = arith.truncf %43 : vector<32x16xf32> to vector<32x16xbf16>
    %cst_19 = arith.constant dense<0.000000e+00> : vector<32x16xf32>
    %46 = tpu.matmul %45, %44, %cst_19 {dimension_numbers = #tpu.dot_dimension_numbers<[1], [0], [0], [1], [0, 0, 1, 1], [], []>} : vector<32x16xbf16>, vector<16x16xbf16>, vector<32x16xf32> -> vector<32x16xf32>
    %47 = arith.addf %41, %46 : vector<32x16xf32>
    %c1 = arith.constant 1 : index
    %c0_20 = arith.constant 0 : index
    %48 = vector.load %arg3[%c1, %c0_20] : memref<16x128xf32, #tpu.memory_space<vmem>>, vector<1x16xf32>
    %49 = vector.broadcast %48 : vector<1x16xf32> to vector<32x16xf32>
    %50 = arith.addf %47, %49 : vector<32x16xf32>
    %cst_21 = arith.constant 0.000000e+00 : f32
    %51 = vector.broadcast %cst_21 : f32 to vector<32x16xf32>
    %52 = arith.cmpf ogt, %50, %51 : vector<32x16xf32>
    %cst_22 = arith.constant 1.000000e-01 : f32
    %53 = vector.broadcast %cst_22 : f32 to vector<32x16xf32>
    %54 = arith.mulf %53, %50 : vector<32x16xf32>
    %55 = arith.select %52, %50, %54 : vector<32x16xi1>, vector<32x16xf32>
    %56 = vector.shape_cast %55 : vector<32x16xf32> to vector<2x16x16xf32>
    %57 = vector.shape_cast %0 : vector<2x16x4xf32> to vector<32x4xf32>
    %c72 = arith.constant 72 : index
    %c0_23 = arith.constant 0 : index
    %58 = vector.load %arg2[%c72, %c0_23] : memref<560x128xbf16, #tpu.memory_space<vmem>>, vector<4x16xbf16>
    %59 = arith.truncf %57 : vector<32x4xf32> to vector<32x4xbf16>
    %cst_24 = arith.constant dense<0.000000e+00> : vector<32x16xf32>
    %60 = tpu.matmul %59, %58, %cst_24 {dimension_numbers = #tpu.dot_dimension_numbers<[1], [0], [0], [1], [0, 0, 1, 1], [], []>} : vector<32x4xbf16>, vector<4x16xbf16>, vector<32x16xf32> -> vector<32x16xf32>
    %c2 = arith.constant 2 : index
    %c0_25 = arith.constant 0 : index
    %61 = vector.load %arg3[%c2, %c0_25] : memref<16x128xf32, #tpu.memory_space<vmem>>, vector<1x16xf32>
    %62 = vector.broadcast %61 : vector<1x16xf32> to vector<32x16xf32>
    %63 = arith.addf %60, %62 : vector<32x16xf32>
    %64 = vector.shape_cast %56 : vector<2x16x16xf32> to vector<32x16xf32>
    %65 = arith.addf %64, %63 : vector<32x16xf32>
    %cst_26 = arith.constant 0.000000e+00 : f32
    %66 = vector.broadcast %cst_26 : f32 to vector<32x16xf32>
    %67 = arith.cmpf ogt, %65, %66 : vector<32x16xf32>
    %cst_27 = arith.constant 1.000000e-01 : f32
    %68 = vector.broadcast %cst_27 : f32 to vector<32x16xf32>
    %69 = arith.mulf %68, %65 : vector<32x16xf32>
    %70 = arith.select %67, %65, %69 : vector<32x16xi1>, vector<32x16xf32>
    %71 = vector.shape_cast %70 : vector<32x16xf32> to vector<2x16x16xf32>
    %cst_28 = arith.constant 0.000000e+00 : f32
    %72 = vector.broadcast %cst_28 : f32 to vector<2x4x16xf32>
    %73 = tpu.concatenate %72, %71 in 1 : vector<2x4x16xf32>, vector<2x16x16xf32> -> vector<2x20x16xf32>
    %74 = vector.extract_strided_slice %73 {offsets = [0, 0, 0], sizes = [2, 16, 16], strides = [1, 1, 1]} : vector<2x20x16xf32> to vector<2x16x16xf32>
    %75 = vector.shape_cast %74 : vector<2x16x16xf32> to vector<32x16xf32>
    %c80 = arith.constant 80 : index
    %c0_29 = arith.constant 0 : index
    %76 = vector.load %arg2[%c80, %c0_29] : memref<560x128xbf16, #tpu.memory_space<vmem>>, vector<16x32xbf16>
    %77 = arith.truncf %75 : vector<32x16xf32> to vector<32x16xbf16>
    %cst_30 = arith.constant dense<0.000000e+00> : vector<32x32xf32>
    %78 = tpu.matmul %77, %76, %cst_30 {dimension_numbers = #tpu.dot_dimension_numbers<[1], [0], [0], [1], [0, 0, 1, 1], [], []>} : vector<32x16xbf16>, vector<16x32xbf16>, vector<32x32xf32> -> vector<32x32xf32>
    %79 = vector.extract_strided_slice %73 {offsets = [0, 2, 0], sizes = [2, 16, 16], strides = [1, 1, 1]} : vector<2x20x16xf32> to vector<2x16x16xf32>
    %80 = vector.shape_cast %79 : vector<2x16x16xf32> to vector<32x16xf32>
    %c128 = arith.constant 128 : index
    %c0_31 = arith.constant 0 : index
    %81 = vector.load %arg2[%c128, %c0_31] : memref<560x128xbf16, #tpu.memory_space<vmem>>, vector<16x32xbf16>
    %82 = arith.truncf %80 : vector<32x16xf32> to vector<32x16xbf16>
    %cst_32 = arith.constant dense<0.000000e+00> : vector<32x32xf32>
    %83 = tpu.matmul %82, %81, %cst_32 {dimension_numbers = #tpu.dot_dimension_numbers<[1], [0], [0], [1], [0, 0, 1, 1], [], []>} : vector<32x16xbf16>, vector<16x32xbf16>, vector<32x32xf32> -> vector<32x32xf32>
    %84 = arith.addf %78, %83 : vector<32x32xf32>
    %85 = vector.extract_strided_slice %73 {offsets = [0, 4, 0], sizes = [2, 16, 16], strides = [1, 1, 1]} : vector<2x20x16xf32> to vector<2x16x16xf32>
    %86 = vector.shape_cast %85 : vector<2x16x16xf32> to vector<32x16xf32>
    %c176 = arith.constant 176 : index
    %c0_33 = arith.constant 0 : index
    %87 = vector.load %arg2[%c176, %c0_33] : memref<560x128xbf16, #tpu.memory_space<vmem>>, vector<16x32xbf16>
    %88 = arith.truncf %86 : vector<32x16xf32> to vector<32x16xbf16>
    %cst_34 = arith.constant dense<0.000000e+00> : vector<32x32xf32>
    %89 = tpu.matmul %88, %87, %cst_34 {dimension_numbers = #tpu.dot_dimension_numbers<[1], [0], [0], [1], [0, 0, 1, 1], [], []>} : vector<32x16xbf16>, vector<16x32xbf16>, vector<32x32xf32> -> vector<32x32xf32>
    %90 = arith.addf %84, %89 : vector<32x32xf32>
    %c3 = arith.constant 3 : index
    %c0_35 = arith.constant 0 : index
    %91 = vector.load %arg3[%c3, %c0_35] : memref<16x128xf32, #tpu.memory_space<vmem>>, vector<1x32xf32>
    %92 = vector.broadcast %91 : vector<1x32xf32> to vector<32x32xf32>
    %93 = arith.addf %90, %92 : vector<32x32xf32>
    %cst_36 = arith.constant 0.000000e+00 : f32
    %94 = vector.broadcast %cst_36 : f32 to vector<32x32xf32>
    %95 = arith.cmpf ogt, %93, %94 : vector<32x32xf32>
    %cst_37 = arith.constant 1.000000e-01 : f32
    %96 = vector.broadcast %cst_37 : f32 to vector<32x32xf32>
    %97 = arith.mulf %96, %93 : vector<32x32xf32>
    %98 = arith.select %95, %93, %97 : vector<32x32xi1>, vector<32x32xf32>
    %99 = vector.shape_cast %98 : vector<32x32xf32> to vector<2x16x32xf32>
    %cst_38 = arith.constant 0.000000e+00 : f32
    %100 = vector.broadcast %cst_38 : f32 to vector<2x4x32xf32>
    %101 = tpu.concatenate %100, %99 in 1 : vector<2x4x32xf32>, vector<2x16x32xf32> -> vector<2x20x32xf32>
    %102 = vector.extract_strided_slice %101 {offsets = [0, 0, 0], sizes = [2, 16, 32], strides = [1, 1, 1]} : vector<2x20x32xf32> to vector<2x16x32xf32>
    %103 = vector.shape_cast %102 : vector<2x16x32xf32> to vector<32x32xf32>
    %c96 = arith.constant 96 : index
    %c0_39 = arith.constant 0 : index
    %104 = vector.load %arg2[%c96, %c0_39] : memref<560x128xbf16, #tpu.memory_space<vmem>>, vector<32x32xbf16>
    %105 = arith.truncf %103 : vector<32x32xf32> to vector<32x32xbf16>
    %cst_40 = arith.constant dense<0.000000e+00> : vector<32x32xf32>
    %106 = tpu.matmul %105, %104, %cst_40 {dimension_numbers = #tpu.dot_dimension_numbers<[1], [0], [0], [1], [0, 0, 1, 1], [], []>} : vector<32x32xbf16>, vector<32x32xbf16>, vector<32x32xf32> -> vector<32x32xf32>
    %107 = vector.extract_strided_slice %101 {offsets = [0, 2, 0], sizes = [2, 16, 32], strides = [1, 1, 1]} : vector<2x20x32xf32> to vector<2x16x32xf32>
    %108 = vector.shape_cast %107 : vector<2x16x32xf32> to vector<32x32xf32>
    %c144 = arith.constant 144 : index
    %c0_41 = arith.constant 0 : index
    %109 = vector.load %arg2[%c144, %c0_41] : memref<560x128xbf16, #tpu.memory_space<vmem>>, vector<32x32xbf16>
    %110 = arith.truncf %108 : vector<32x32xf32> to vector<32x32xbf16>
    %cst_42 = arith.constant dense<0.000000e+00> : vector<32x32xf32>
    %111 = tpu.matmul %110, %109, %cst_42 {dimension_numbers = #tpu.dot_dimension_numbers<[1], [0], [0], [1], [0, 0, 1, 1], [], []>} : vector<32x32xbf16>, vector<32x32xbf16>, vector<32x32xf32> -> vector<32x32xf32>
    %112 = arith.addf %106, %111 : vector<32x32xf32>
    %113 = vector.extract_strided_slice %101 {offsets = [0, 4, 0], sizes = [2, 16, 32], strides = [1, 1, 1]} : vector<2x20x32xf32> to vector<2x16x32xf32>
    %114 = vector.shape_cast %113 : vector<2x16x32xf32> to vector<32x32xf32>
    %c192 = arith.constant 192 : index
    %c0_43 = arith.constant 0 : index
    %115 = vector.load %arg2[%c192, %c0_43] : memref<560x128xbf16, #tpu.memory_space<vmem>>, vector<32x32xbf16>
    %116 = arith.truncf %114 : vector<32x32xf32> to vector<32x32xbf16>
    %cst_44 = arith.constant dense<0.000000e+00> : vector<32x32xf32>
    %117 = tpu.matmul %116, %115, %cst_44 {dimension_numbers = #tpu.dot_dimension_numbers<[1], [0], [0], [1], [0, 0, 1, 1], [], []>} : vector<32x32xbf16>, vector<32x32xbf16>, vector<32x32xf32> -> vector<32x32xf32>
    %118 = arith.addf %112, %117 : vector<32x32xf32>
    %c4 = arith.constant 4 : index
    %c0_45 = arith.constant 0 : index
    %119 = vector.load %arg3[%c4, %c0_45] : memref<16x128xf32, #tpu.memory_space<vmem>>, vector<1x32xf32>
    %120 = vector.broadcast %119 : vector<1x32xf32> to vector<32x32xf32>
    %121 = arith.addf %118, %120 : vector<32x32xf32>
    %cst_46 = arith.constant 0.000000e+00 : f32
    %122 = vector.broadcast %cst_46 : f32 to vector<32x32xf32>
    %123 = arith.cmpf ogt, %121, %122 : vector<32x32xf32>
    %cst_47 = arith.constant 1.000000e-01 : f32
    %124 = vector.broadcast %cst_47 : f32 to vector<32x32xf32>
    %125 = arith.mulf %124, %121 : vector<32x32xf32>
    %126 = arith.select %123, %121, %125 : vector<32x32xi1>, vector<32x32xf32>
    %127 = vector.shape_cast %126 : vector<32x32xf32> to vector<2x16x32xf32>
    %128 = vector.shape_cast %71 : vector<2x16x16xf32> to vector<32x16xf32>
    %c224 = arith.constant 224 : index
    %c0_48 = arith.constant 0 : index
    %129 = vector.load %arg2[%c224, %c0_48] : memref<560x128xbf16, #tpu.memory_space<vmem>>, vector<16x32xbf16>
    %130 = arith.truncf %128 : vector<32x16xf32> to vector<32x16xbf16>
    %cst_49 = arith.constant dense<0.000000e+00> : vector<32x32xf32>
    %131 = tpu.matmul %130, %129, %cst_49 {dimension_numbers = #tpu.dot_dimension_numbers<[1], [0], [0], [1], [0, 0, 1, 1], [], []>} : vector<32x16xbf16>, vector<16x32xbf16>, vector<32x32xf32> -> vector<32x32xf32>
    %c5 = arith.constant 5 : index
    %c0_50 = arith.constant 0 : index
    %132 = vector.load %arg3[%c5, %c0_50] : memref<16x128xf32, #tpu.memory_space<vmem>>, vector<1x32xf32>
    %133 = vector.broadcast %132 : vector<1x32xf32> to vector<32x32xf32>
    %134 = arith.addf %131, %133 : vector<32x32xf32>
    %135 = vector.shape_cast %127 : vector<2x16x32xf32> to vector<32x32xf32>
    %136 = arith.addf %135, %134 : vector<32x32xf32>
    %cst_51 = arith.constant 0.000000e+00 : f32
    %137 = vector.broadcast %cst_51 : f32 to vector<32x32xf32>
    %138 = arith.cmpf ogt, %136, %137 : vector<32x32xf32>
    %cst_52 = arith.constant 1.000000e-01 : f32
    %139 = vector.broadcast %cst_52 : f32 to vector<32x32xf32>
    %140 = arith.mulf %139, %136 : vector<32x32xf32>
    %141 = arith.select %138, %136, %140 : vector<32x32xi1>, vector<32x32xf32>
    %142 = vector.shape_cast %141 : vector<32x32xf32> to vector<2x16x32xf32>
    %143 = vector.shape_cast %142 : vector<2x16x32xf32> to vector<32x32xf32>
    %c240 = arith.constant 240 : index
    %c0_53 = arith.constant 0 : index
    %144 = vector.load %arg2[%c240, %c0_53] : memref<560x128xbf16, #tpu.memory_space<vmem>>, vector<32x36xbf16>
    %145 = arith.truncf %143 : vector<32x32xf32> to vector<32x32xbf16>
    %cst_54 = arith.constant dense<0.000000e+00> : vector<32x36xf32>
    %146 = tpu.matmul %145, %144, %cst_54 {dimension_numbers = #tpu.dot_dimension_numbers<[1], [0], [0], [1], [0, 0, 1, 1], [], []>} : vector<32x32xbf16>, vector<32x36xbf16>, vector<32x36xf32> -> vector<32x36xf32>
    %c6 = arith.constant 6 : index
    %c0_55 = arith.constant 0 : index
    %147 = vector.load %arg3[%c6, %c0_55] : memref<16x128xf32, #tpu.memory_space<vmem>>, vector<1x36xf32>
    %148 = vector.broadcast %147 : vector<1x36xf32> to vector<32x36xf32>
    %149 = arith.addf %146, %148 : vector<32x36xf32>
    %150 = vector.extract_strided_slice %149 {offsets = [0, 0], sizes = [32, 32], strides = [1, 1]} : vector<32x36xf32> to vector<32x32xf32>
    %151 = vector.shape_cast %150 : vector<32x32xf32> to vector<2x16x32xf32>
    %152 = vector.extract_strided_slice %149 {offsets = [0, 32], sizes = [32, 4], strides = [1, 1]} : vector<32x36xf32> to vector<32x4xf32>
    %153 = vector.shape_cast %152 : vector<32x4xf32> to vector<2x16x4xf32>
    %154 = vector.extract_strided_slice %142 {offsets = [0, 15, 0], sizes = [2, 1, 32], strides = [1, 1, 1]} : vector<2x16x32xf32> to vector<2x1x32xf32>
    %155 = vector.shape_cast %154 : vector<2x1x32xf32> to vector<2x32xf32>
    %c272 = arith.constant 272 : index
    %c0_56 = arith.constant 0 : index
    %156 = vector.load %arg2[%c272, %c0_56] : memref<560x128xbf16, #tpu.memory_space<vmem>>, vector<32x4xbf16>
    %157 = arith.truncf %155 : vector<2x32xf32> to vector<2x32xbf16>
    %cst_57 = arith.constant dense<0.000000e+00> : vector<2x4xf32>
    %158 = tpu.matmul %157, %156, %cst_57 {dimension_numbers = #tpu.dot_dimension_numbers<[1], [0], [0], [1], [0, 0, 1, 1], [], []>} : vector<2x32xbf16>, vector<32x4xbf16>, vector<2x4xf32> -> vector<2x4xf32>
    %c7 = arith.constant 7 : index
    %c0_58 = arith.constant 0 : index
    %159 = vector.load %arg3[%c7, %c0_58] : memref<16x128xf32, #tpu.memory_space<vmem>>, vector<1x4xf32>
    %160 = vector.broadcast %159 : vector<1x4xf32> to vector<2x4xf32>
    %161 = arith.addf %158, %160 : vector<2x4xf32>
    %162 = vector.shape_cast %161 : vector<2x4xf32> to vector<2x1x4xf32>
    %163 = vector.broadcast %162 : vector<2x1x4xf32> to vector<2x16x4xf32>
    %164 = arith.mulf %163, %153 : vector<2x16x4xf32>
    %cst_59 = arith.constant dense<0.000000e+00> : vector<2x16xf32>
    %165 = vector.multi_reduction <add>, %164, %cst_59 [2] : vector<2x16x4xf32> to vector<2x16xf32>
    %cst_60 = arith.constant dense<0xFF800000> : vector<2xf32>
    %166 = vector.multi_reduction <maximumf>, %165, %cst_60 [1] : vector<2x16xf32> to vector<2xf32>
    %167 = vector.shape_cast %166 : vector<2xf32> to vector<2x1xf32>
    %168 = vector.broadcast %167 : vector<2x1xf32> to vector<2x16xf32>
    %169 = arith.subf %165, %168 : vector<2x16xf32>
    %170 = math.exp %169 : vector<2x16xf32>
    %cst_61 = arith.constant dense<0.000000e+00> : vector<2xf32>
    %171 = vector.multi_reduction <add>, %170, %cst_61 [1] : vector<2x16xf32> to vector<2xf32>
    %172 = vector.shape_cast %171 : vector<2xf32> to vector<2x1xf32>
    %173 = vector.broadcast %172 : vector<2x1xf32> to vector<2x16xf32>
    %174 = arith.divf %170, %173 : vector<2x16xf32>
    %175 = vector.shape_cast %174 : vector<2x16xf32> to vector<2x16x1xf32>
    %176 = vector.broadcast %175 : vector<2x16x1xf32> to vector<2x16x32xf32>
    %177 = arith.mulf %176, %151 : vector<2x16x32xf32>
    %cst_62 = arith.constant dense<0.000000e+00> : vector<2x32xf32>
    %178 = vector.multi_reduction <add>, %177, %cst_62 [1] : vector<2x16x32xf32> to vector<2x32xf32>
    %c8_63 = arith.constant 8 : index
    %c0_64 = arith.constant 0 : index
    %179 = vector.load %arg3[%c8_63, %c0_64] : memref<16x128xf32, #tpu.memory_space<vmem>>, vector<1x1xf32>
    %180 = vector.broadcast %179 : vector<1x1xf32> to vector<2x32xf32>
    %181 = arith.mulf %180, %178 : vector<2x32xf32>
    %182 = arith.addf %181, %155 : vector<2x32xf32>
    %c304 = arith.constant 304 : index
    %c0_65 = arith.constant 0 : index
    %183 = vector.load %arg2[%c304, %c0_65] : memref<560x128xbf16, #tpu.memory_space<vmem>>, vector<32x128xbf16>
    %184 = arith.truncf %182 : vector<2x32xf32> to vector<2x32xbf16>
    %cst_66 = arith.constant dense<0.000000e+00> : vector<2x128xf32>
    %185 = tpu.matmul %184, %183, %cst_66 {dimension_numbers = #tpu.dot_dimension_numbers<[1], [0], [0], [1], [0, 0, 1, 1], [], []>} : vector<2x32xbf16>, vector<32x128xbf16>, vector<2x128xf32> -> vector<2x128xf32>
    %c9 = arith.constant 9 : index
    %c0_67 = arith.constant 0 : index
    %186 = vector.load %arg3[%c9, %c0_67] : memref<16x128xf32, #tpu.memory_space<vmem>>, vector<1x128xf32>
    %187 = vector.broadcast %186 : vector<1x128xf32> to vector<2x128xf32>
    %188 = arith.addf %185, %187 : vector<2x128xf32>
    %cst_68 = arith.constant 0.000000e+00 : f32
    %189 = vector.broadcast %cst_68 : f32 to vector<2x128xf32>
    %190 = arith.cmpf ogt, %188, %189 : vector<2x128xf32>
    %cst_69 = arith.constant 1.000000e-01 : f32
    %191 = vector.broadcast %cst_69 : f32 to vector<2x128xf32>
    %192 = arith.mulf %191, %188 : vector<2x128xf32>
    %193 = arith.select %190, %188, %192 : vector<2x128xi1>, vector<2x128xf32>
    %c336 = arith.constant 336 : index
    %c0_70 = arith.constant 0 : index
    %194 = vector.load %arg2[%c336, %c0_70] : memref<560x128xbf16, #tpu.memory_space<vmem>>, vector<128x64xbf16>
    %195 = arith.truncf %193 : vector<2x128xf32> to vector<2x128xbf16>
    %cst_71 = arith.constant dense<0.000000e+00> : vector<2x64xf32>
    %196 = tpu.matmul %195, %194, %cst_71 {dimension_numbers = #tpu.dot_dimension_numbers<[1], [0], [0], [1], [0, 0, 1, 1], [], []>} : vector<2x128xbf16>, vector<128x64xbf16>, vector<2x64xf32> -> vector<2x64xf32>
    %c10 = arith.constant 10 : index
    %c0_72 = arith.constant 0 : index
    %197 = vector.load %arg3[%c10, %c0_72] : memref<16x128xf32, #tpu.memory_space<vmem>>, vector<1x64xf32>
    %198 = vector.broadcast %197 : vector<1x64xf32> to vector<2x64xf32>
    %199 = arith.addf %196, %198 : vector<2x64xf32>
    %cst_73 = arith.constant 0.000000e+00 : f32
    %200 = vector.broadcast %cst_73 : f32 to vector<2x64xf32>
    %201 = arith.cmpf ogt, %199, %200 : vector<2x64xf32>
    %cst_74 = arith.constant 1.000000e-01 : f32
    %202 = vector.broadcast %cst_74 : f32 to vector<2x64xf32>
    %203 = arith.mulf %202, %199 : vector<2x64xf32>
    %204 = arith.select %201, %199, %203 : vector<2x64xi1>, vector<2x64xf32>
    %c464 = arith.constant 464 : index
    %c0_75 = arith.constant 0 : index
    %205 = vector.load %arg2[%c464, %c0_75] : memref<560x128xbf16, #tpu.memory_space<vmem>>, vector<64x32xbf16>
    %206 = arith.truncf %204 : vector<2x64xf32> to vector<2x64xbf16>
    %cst_76 = arith.constant dense<0.000000e+00> : vector<2x32xf32>
    %207 = tpu.matmul %206, %205, %cst_76 {dimension_numbers = #tpu.dot_dimension_numbers<[1], [0], [0], [1], [0, 0, 1, 1], [], []>} : vector<2x64xbf16>, vector<64x32xbf16>, vector<2x32xf32> -> vector<2x32xf32>
    %c11 = arith.constant 11 : index
    %c0_77 = arith.constant 0 : index
    %208 = vector.load %arg3[%c11, %c0_77] : memref<16x128xf32, #tpu.memory_space<vmem>>, vector<1x32xf32>
    %209 = vector.broadcast %208 : vector<1x32xf32> to vector<2x32xf32>
    %210 = arith.addf %207, %209 : vector<2x32xf32>
    %cst_78 = arith.constant 0.000000e+00 : f32
    %211 = vector.broadcast %cst_78 : f32 to vector<2x32xf32>
    %212 = arith.cmpf ogt, %210, %211 : vector<2x32xf32>
    %cst_79 = arith.constant 1.000000e-01 : f32
    %213 = vector.broadcast %cst_79 : f32 to vector<2x32xf32>
    %214 = arith.mulf %213, %210 : vector<2x32xf32>
    %215 = arith.select %212, %210, %214 : vector<2x32xi1>, vector<2x32xf32>
    %c528 = arith.constant 528 : index
    %c0_80 = arith.constant 0 : index
    %216 = vector.load %arg2[%c528, %c0_80] : memref<560x128xbf16, #tpu.memory_space<vmem>>, vector<32x1xbf16>
    %217 = arith.truncf %215 : vector<2x32xf32> to vector<2x32xbf16>
    %cst_81 = arith.constant dense<0.000000e+00> : vector<2x1xf32>
    %218 = tpu.matmul %217, %216, %cst_81 {dimension_numbers = #tpu.dot_dimension_numbers<[1], [0], [0], [1], [0, 0, 1, 1], [], []>} : vector<2x32xbf16>, vector<32x1xbf16>, vector<2x1xf32> -> vector<2x1xf32>
    %c12 = arith.constant 12 : index
    %c0_82 = arith.constant 0 : index
    %219 = vector.load %arg3[%c12, %c0_82] : memref<16x128xf32, #tpu.memory_space<vmem>>, vector<1x1xf32>
    %220 = vector.broadcast %219 : vector<1x1xf32> to vector<2x1xf32>
    %221 = arith.addf %218, %220 : vector<2x1xf32>
    %c0_83 = arith.constant 0 : index
    %c0_84 = arith.constant 0 : index
    %222 = vector.load %arg4[%c0_83, %c0_84] : memref<2x1xf32, #tpu.memory_space<vmem>>, vector<2x1xf32>
    tpu.vector_store %arg4[%c0_83, %c0_84], %221 {strides = array<i32>} : memref<2x1xf32, #tpu.memory_space<vmem>>, vector<2x1xf32>,
    return
  }
  func.func @transform_0(%arg0: i32) -> (i32, i32, i32) {
    %c0_i32 = arith.constant 0 : i32
    %c0_i32_0 = arith.constant 0 : i32
    %c0_i32_1 = arith.constant 0 : i32
    return %arg0, %c0_i32, %c0_i32_0 : i32, i32, i32
  }
  func.func @transform_1(%arg0: i32) -> (i32, i32) {
    %c0_i32 = arith.constant 0 : i32
    %c0_i32_0 = arith.constant 0 : i32
    %c0_i32_1 = arith.constant 0 : i32
    return %c0_i32, %c0_i32_0 : i32, i32
  }
  func.func @transform_2(%arg0: i32) -> (i32, i32) {
    %c0_i32 = arith.constant 0 : i32
    %c0_i32_0 = arith.constant 0 : i32
    %c0_i32_1 = arith.constant 0 : i32
    return %c0_i32, %c0_i32_0 : i32, i32
  }
  func.func @transform_3(%arg0: i32) -> (i32, i32) {
    %c0_i32 = arith.constant 0 : i32
    %c0_i32_0 = arith.constant 0 : i32
    return %arg0, %c0_i32 : i32, i32
  }
}

</mosaic_0001>

<llo_original>
// kernel: fwd.1
$region0: #{fwd.1}
  #allocation0 [shape = 'u32[]', space=smem, size = 0x4, offset = 0x4, fixed_abs, tag = 'smem constant byte address 0x4 - core index']
  #allocation1 [shape = 'u32[144,128]{1,0:T(1,128)}', space=vmem, size = 0x12000, scoped, tag = 'internal scratch']
  %s0 = inlined_call_operand.vmem [shape: f32[2,16,4], index: 0, kind: input, shape index: {}]
  %s1 = inlined_call_operand.hbm [shape: bf16[560,128], index: 1, kind: input, shape index: {}]
  %s2 = inlined_call_operand.vmem [shape: f32[16,128], index: 2, kind: input, shape index: {}]
  %s3 = inlined_call_operand.vmem [shape: f32[2,1], index: 3, kind: output, shape index: {}]
  %s4 = sld [smem:[#allocation0]]
  $region26: #{fwd.1} parent=0
    _
  %s6 = ssub.s32 1, %s4
  %s7 = scalar_select 0, %s6, %s4
  $region1: #{fwd.1} parent=0
    #allocation2 [shape = 'u8[143360]{0}', space=vmem, size = 0x23000, scoped, tag = 'input window, operand 1, single buffered']
    #allocation3 [shape = 's32[1]{0}', space=sflag, size = 0x4, scoped, tag = 'scoped memory for fwd.1']
    %8 = vsyncpa [#allocation3], 0
    // Predicated region
    $region2: #{fwd.1} parent=1 // pred_check
      _
    $region3: #{fwd.1} parent=1 // pred_check_branch
      %10 = sbr.rel (0) target = $region5
    $region4: #{fwd.1} parent=1 // pred_region
      _
    $region5: #{fwd.1} parent=1 // pred_fallthru
      _
    // Predicated region
    $region6: #{fwd.1} parent=1 // pred_check
      _
    $region7: #{fwd.1} parent=1 // pred_check_branch
      %12 = sbr.rel (0) target = $region9
    $region8: #{fwd.1} parent=1 // pred_region
      %s14 = ssub.s32 4480, 4480
      %15 = vsyncadd [#allocation3], %s14
      %s16 = sshll.u32 [#allocation2], 4
      %s17 = int_to_ptr.vmem [resolvable:$true] %s16
      %22 = dma.hbm_to_vmem [thread:$0]  %s1, 4480, %s17, [#allocation3], 64, 64, 4
    $region9: #{fwd.1} parent=1 // pred_fallthru
      _
    // Predicated region
    $region10: #{fwd.1} parent=1 // pred_check
      _
    $region11: #{fwd.1} parent=1 // pred_check_branch
      %24 = sbr.rel (0) target = $region13
    $region12: #{fwd.1} parent=1 // pred_region
      _
    $region13: #{fwd.1} parent=1 // pred_fallthru
      _
    // Predicated region
    $region14: #{fwd.1} parent=1 // pred_check
      _
    $region15: #{fwd.1} parent=1 // pred_check_branch
      %26 = sbr.rel (0) target = $region17
    $region16: #{fwd.1} parent=1 // pred_region
      %27 = dma.done [#allocation3], 4480
    $region17: #{fwd.1} parent=1 // pred_fallthru
      _
    %v29 = vld [vmem:[%s0] sm:$0xff]
    %v30 = vld [vmem:[%s0 + $0x8] sm:$0xff]
    %v31 = vld [vmem:[%s0 + $0x10] sm:$0xff]
    %v32 = vld [vmem:[%s0 + $0x18] sm:$0xff]
    %vm37 = vcmask 1041408
    %v38 = vrot.slane %v29, 6
    %v39 = vrot.slane %v30, 6
    %v40 = vsel %vm37, %v38, %v39
    %v41 = vrot.slane %v31, 6
    %v42 = vrot.slane %v32, 6
    %v43 = vsel %vm37, %v41, %v42
    %v48 = vsel %vm37, 0.0, %v38
    %v49 = vsel %vm37, 0.0, %v41
    %v50 = vld [vmem:[#allocation2] sm:$0x3]
    %v51 = vpack.c.bf16 %v40, %v48
    %v52 = vpack.c.bf16 %v43, %v49
    %vm55 = vcmask 1046528
    %v56 = vrot.slane %v48, 1
    %v57 = vrot.slane %v40, 1
    %v58 = vsel %vm55, %v56, %v57
    %v59 = vrot.slane %v39, 1
    %v60 = vsel %vm55, %v57, %v59
    %v61 = vrot.slane %v49, 1
    %v62 = vrot.slane %v43, 1
    %v63 = vsel %vm55, %v61, %v62
    %v64 = vrot.slane %v42, 1
    %v65 = vsel %vm55, %v62, %v64
    %v70 = vld [vmem:[#allocation2 + $0xc] sm:$0x3]
    %v71 = vpack.c.bf16 %v60, %v58
    %v72 = vpack.c.bf16 %v65, %v63
    %vm73 = vcmask 31744
    %v75 = vsel %vm73, %v71, 0
    %v78 = vsel %vm73, %v72, 0
    %v81 = vsel %vm37, %v70, 0
    %83 = vmatprep.subr.bf16.mxu0 0
    %84 = vmatpush1.bf16.msra.mxu0 0
    %85 = vmatprep.subr.bf16.mxu0 0
    %86 = vmatpush1.bf16.msra.mxu0 0
    %87 = vmatprep.subr.bf16.mxu0 0
    %88 = vmatpush1.bf16.msra.mxu0 0
    %89 = vmatprep.subr.bf16.mxu0 0
    %90 = vmatpush1.bf16.msra.mxu0 0
    %91 = vmatprep.subr.bf16.mxu0 0
    %92 = vmatpush1.bf16.msra.mxu0 0
    %93 = vmatprep.subr.bf16.mxu0 0
    %94 = vmatpush1.bf16.msra.mxu0 0
    %95 = vmatprep.subr.bf16.mxu0 0
    %96 = vmatpush1.bf16.msra.mxu0 0
    %97 = vmatprep.subr.bf16.mxu0 0
    %98 = vmatpush1.bf16.msra.mxu0 %v81
    %99 = vmatprep.subr.bf16.mxu0 0
    %100 = vmatpush2.bf16.msra.mxu0 0
    %101 = vmatprep.subr.bf16.mxu0 0
    %102 = vmatpush2.bf16.msra.mxu0 0
    %103 = vmatprep.subr.bf16.mxu0 0
    %104 = vmatpush2.bf16.msra.mxu0 0
    %105 = vmatprep.subr.bf16.mxu0 0
    %106 = vmatpush2.bf16.msra.mxu0 0
    %107 = vmatprep.subr.bf16.mxu0 0
    %108 = vmatpush2.bf16.msra.mxu0 0
    %109 = vmatprep.subr.bf16.mxu0 0
    %110 = vmatpush2.bf16.msra.mxu0 0
    %111 = vmatprep.subr.bf16.mxu0 0
    %112 = vmatpush2.bf16.msra.mxu0 0
    %113 = vmatprep.subr.bf16.mxu0 0
    %114 = vmatpush2.bf16.msra.mxu0 0
    %115 = vmatprep.mubr.bf16.mxu0 0
    %116 = vmatmul.mubr.bf16.gmra.mxu0 %v75
    %v117 = vpop.f32.mrf.mxu0
    %v118 = vadd.f32 0.0, %v117
    %v119 = vpop.f32.mrf.mxu0
    %v120 = vpop.f32.mrf.mxu0
    %v121 = vadd.f32 0.0, %v120
    %v122 = vpop.f32.mrf.mxu0
    %123 = vmatprep.mubr.bf16.mxu0 0
    %124 = vmatmul.mubr.bf16.gmra.mxu0 %v78
    %v125 = vpop.f32.mrf.mxu0
    %v126 = vadd.f32 0.0, %v125
    %v127 = vpop.f32.mrf.mxu0
    %v128 = vpop.f32.mrf.mxu0
    %v129 = vadd.f32 0.0, %v128
    %v130 = vpop.f32.mrf.mxu0
    %131 = vdwg.mxu0
    %v133 = vsel %vm73, %v51, 0
    %v136 = vsel %vm73, %v52, 0
    %v139 = vsel %vm37, %v50, 0
    %141 = vmatprep.subr.bf16.mxu0 0
    %142 = vmatpush1.bf16.msra.mxu0 0
    %143 = vmatprep.subr.bf16.mxu0 0
    %144 = vmatpush1.bf16.msra.mxu0 0
    %145 = vmatprep.subr.bf16.mxu0 0
    %146 = vmatpush1.bf16.msra.mxu0 0
    %147 = vmatprep.subr.bf16.mxu0 0
    %148 = vmatpush1.bf16.msra.mxu0 0
    %149 = vmatprep.subr.bf16.mxu0 0
    %150 = vmatpush1.bf16.msra.mxu0 0
    %151 = vmatprep.subr.bf16.mxu0 0
    %152 = vmatpush1.bf16.msra.mxu0 0
    %153 = vmatprep.subr.bf16.mxu0 0
    %154 = vmatpush1.bf16.msra.mxu0 0
    %155 = vmatprep.subr.bf16.mxu0 0
    %156 = vmatpush1.bf16.msra.mxu0 %v139
    %157 = vmatprep.subr.bf16.mxu0 0
    %158 = vmatpush2.bf16.msra.mxu0 0
    %159 = vmatprep.subr.bf16.mxu0 0
    %160 = vmatpush2.bf16.msra.mxu0 0
    %161 = vmatprep.subr.bf16.mxu0 0
    %162 = vmatpush2.bf16.msra.mxu0 0
    %163 = vmatprep.subr.bf16.mxu0 0
    %164 = vmatpush2.bf16.msra.mxu0 0
    %165 = vmatprep.subr.bf16.mxu0 0
    %166 = vmatpush2.bf16.msra.mxu0 0
    %167 = vmatprep.subr.bf16.mxu0 0
    %168 = vmatpush2.bf16.msra.mxu0 0
    %169 = vmatprep.subr.bf16.mxu0 0
    %170 = vmatpush2.bf16.msra.mxu0 0
    %171 = vmatprep.subr.bf16.mxu0 0
    %172 = vmatpush2.bf16.msra.mxu0 0
    %173 = vmatprep.mubr.bf16.mxu0 0
    %174 = vmatmul.mubr.bf16.gmra.mxu0 %v133
    %v175 = vpop.f32.mrf.mxu0
    %v176 = vadd.f32 %v118, %v175
    %v177 = vpop.f32.mrf.mxu0
    %v178 = vpop.f32.mrf.mxu0
    %v179 = vadd.f32 %v121, %v178
    %v180 = vpop.f32.mrf.mxu0
    %181 = vmatprep.mubr.bf16.mxu0 0
    %182 = vmatmul.mubr.bf16.gmra.mxu0 %v136
    %v183 = vpop.f32.mrf.mxu0
    %v184 = vadd.f32 %v126, %v183
    %v185 = vpop.f32.mrf.mxu0
    %v186 = vpop.f32.mrf.mxu0
    %v187 = vadd.f32 %v129, %v186
    %v188 = vpop.f32.mrf.mxu0
    %189 = vdwg.mxu0
    %vm190 = vcmask 1045504
    %v191 = vrot.slane %v48, 2
    %v192 = vrot.slane %v40, 2
    %v193 = vsel %vm190, %v191, %v192
    %v194 = vrot.slane %v39, 2
    %v195 = vsel %vm190, %v192, %v194
    %v196 = vrot.slane %v49, 2
    %v197 = vrot.slane %v43, 2
    %v198 = vsel %vm190, %v196, %v197
    %v199 = vrot.slane %v42, 2
    %v200 = vsel %vm190, %v197, %v199
    %v205 = vld [vmem:[#allocation2 + $0x18] sm:$0x3]
    %v206 = vpack.c.bf16 %v195, %v193
    %v207 = vpack.c.bf16 %v200, %v198
    %v209 = vsel %vm73, %v206, 0
    %v212 = vsel %vm73, %v207, 0
    %v215 = vsel %vm37, %v205, 0
    %217 = vmatprep.subr.bf16.mxu0 0
    %218 = vmatpush1.bf16.msra.mxu0 0
    %219 = vmatprep.subr.bf16.mxu0 0
    %220 = vmatpush1.bf16.msra.mxu0 0
    %221 = vmatprep.subr.bf16.mxu0 0
    %222 = vmatpush1.bf16.msra.mxu0 0
    %223 = vmatprep.subr.bf16.mxu0 0
    %224 = vmatpush1.bf16.msra.mxu0 0
    %225 = vmatprep.subr.bf16.mxu0 0
    %226 = vmatpush1.bf16.msra.mxu0 0
    %227 = vmatprep.subr.bf16.mxu0 0
    %228 = vmatpush1.bf16.msra.mxu0 0
    %229 = vmatprep.subr.bf16.mxu0 0
    %230 = vmatpush1.bf16.msra.mxu0 0
    %231 = vmatprep.subr.bf16.mxu0 0
    %232 = vmatpush1.bf16.msra.mxu0 %v215
    %233 = vmatprep.subr.bf16.mxu0 0
    %234 = vmatpush2.bf16.msra.mxu0 0
    %235 = vmatprep.subr.bf16.mxu0 0
    %236 = vmatpush2.bf16.msra.mxu0 0
    %237 = vmatprep.subr.bf16.mxu0 0
    %238 = vmatpush2.bf16.msra.mxu0 0
    %239 = vmatprep.subr.bf16.mxu0 0
    %240 = vmatpush2.bf16.msra.mxu0 0
    %241 = vmatprep.subr.bf16.mxu0 0
    %242 = vmatpush2.bf16.msra.mxu0 0
    %243 = vmatprep.subr.bf16.mxu0 0
    %244 = vmatpush2.bf16.msra.mxu0 0
    %245 = vmatprep.subr.bf16.mxu0 0
    %246 = vmatpush2.bf16.msra.mxu0 0
    %247 = vmatprep.subr.bf16.mxu0 0
    %248 = vmatpush2.bf16.msra.mxu0 0
    %249 = vmatprep.mubr.bf16.mxu0 0
    %250 = vmatmul.mubr.bf16.gmra.mxu0 %v209
    %v251 = vpop.f32.mrf.mxu0
    %v252 = vadd.f32 0.0, %v251
    %v253 = vpop.f32.mrf.mxu0
    %v254 = vpop.f32.mrf.mxu0
    %v255 = vadd.f32 0.0, %v254
    %v256 = vpop.f32.mrf.mxu0
    %257 = vmatprep.mubr.bf16.mxu0 0
    %258 = vmatmul.mubr.bf16.gmra.mxu0 %v212
    %v259 = vpop.f32.mrf.mxu0
    %v260 = vadd.f32 0.0, %v259
    %v261 = vpop.f32.mrf.mxu0
    %v262 = vpop.f32.mrf.mxu0
    %v263 = vadd.f32 0.0, %v262
    %v264 = vpop.f32.mrf.mxu0
    %265 = vdwg.mxu0
    %v266 = vadd.f32 %v176, %v252
    %v267 = vadd.f32 %v179, %v255
    %v268 = vadd.f32 %v184, %v260
    %v269 = vadd.f32 %v187, %v263
    %v270 = vld [vmem:[%s2] sm:$0x1]
    %v271 = vlaneseq
    %v272 = vshrl.u32 %v271, 7
    %v273 = vsub.s32 0, %v272
    %v274 = vrot.slane %v270, %v273
    %v275 = vadd.f32 %v266, %v274
    %v276 = vadd.f32 %v267, %v274
    %v277 = vadd.f32 %v268, %v274
    %v278 = vadd.f32 %v269, %v274
    %vm279 = vcmp.gt.f32.partialorder %v275, 0.0
    %vm280 = vcmp.gt.f32.partialorder %v276, 0.0
    %vm281 = vcmp.gt.f32.partialorder %v277, 0.0
    %vm282 = vcmp.gt.f32.partialorder %v278, 0.0
    %v283 = vmul.f32 %v275, 0.1
    %v284 = vmul.f32 %v276, 0.1
    %v285 = vmul.f32 %v277, 0.1
    %v286 = vmul.f32 %v278, 0.1
    %v287 = vsel %vm279, %v275, %v283
    %v288 = vsel %vm280, %v276, %v284
    %v289 = vsel %vm281, %v277, %v285
    %v290 = vsel %vm282, %v278, %v286
    %v295 = vrot.slane %v287, 6
    %v296 = vrot.slane %v288, 6
    %v297 = vsel %vm37, %v295, %v296
    %v298 = vrot.slane %v289, 6
    %v299 = vrot.slane %v290, 6
    %v300 = vsel %vm37, %v298, %v299
    %v305 = vsel %vm37, 0.0, %v295
    %v306 = vsel %vm37, 0.0, %v298
    %v307 = vld [vmem:[#allocation2 + $0x4] sm:$0xf]
    %v308 = vld [vmem:[#allocation2 + $0x8] sm:$0xf]
    %v309 = vpack.c.bf16 %v297, %v305
    %v310 = vpack.c.bf16 %v300, %v306
    %v313 = vrot.slane %v305, 1
    %v314 = vrot.slane %v297, 1
    %v315 = vsel %vm55, %v313, %v314
    %v316 = vrot.slane %v296, 1
    %v317 = vsel %vm55, %v314, %v316
    %v318 = vrot.slane %v306, 1
    %v319 = vrot.slane %v300, 1
    %v320 = vsel %vm55, %v318, %v319
    %v321 = vrot.slane %v299, 1
    %v322 = vsel %vm55, %v319, %v321
    %v327 = vld [vmem:[#allocation2 + $0x10] sm:$0xf]
    %v328 = vld [vmem:[#allocation2 + $0x14] sm:$0xf]
    %v329 = vpack.c.bf16 %v317, %v315
    %v330 = vpack.c.bf16 %v322, %v320
    %v333 = vunpack.c.l.b16 %v327
    %v334 = vunpack.c.l.b16 %v328
    %v335 = vpack.c.b16 %v334, %v333
    %vm337 = vcmask 130048
    %v339 = vsel %vm337, %v329, 0
    %v342 = vsel %vm337, %v330, 0
    %344 = vmatprep.subr.bf16.mxu0 0
    %345 = vmatpush1.bf16.msra.mxu0 0
    %346 = vmatprep.subr.bf16.mxu0 0
    %347 = vmatpush1.bf16.msra.mxu0 0
    %348 = vmatprep.subr.bf16.mxu0 0
    %349 = vmatpush1.bf16.msra.mxu0 0
    %350 = vmatprep.subr.bf16.mxu0 0
    %351 = vmatpush1.bf16.msra.mxu0 0
    %352 = vmatprep.subr.bf16.mxu0 0
    %353 = vmatpush1.bf16.msra.mxu0 0
    %354 = vmatprep.subr.bf16.mxu0 0
    %355 = vmatpush1.bf16.msra.mxu0 0
    %356 = vmatprep.subr.bf16.mxu0 0
    %357 = vmatpush1.bf16.msra.mxu0 0
    %358 = vmatprep.subr.bf16.mxu0 0
    %359 = vmatpush1.bf16.msra.mxu0 %v335
    %360 = vmatprep.subr.bf16.mxu0 0
    %361 = vmatpush2.bf16.msra.mxu0 0
    %362 = vmatprep.subr.bf16.mxu0 0
    %363 = vmatpush2.bf16.msra.mxu0 0
    %364 = vmatprep.subr.bf16.mxu0 0
    %365 = vmatpush2.bf16.msra.mxu0 0
    %366 = vmatprep.subr.bf16.mxu0 0
    %367 = vmatpush2.bf16.msra.mxu0 0
    %368 = vmatprep.subr.bf16.mxu0 0
    %369 = vmatpush2.bf16.msra.mxu0 0
    %370 = vmatprep.subr.bf16.mxu0 0
    %371 = vmatpush2.bf16.msra.mxu0 0
    %372 = vmatprep.subr.bf16.mxu0 0
    %373 = vmatpush2.bf16.msra.mxu0 0
    %374 = vmatprep.subr.bf16.mxu0 0
    %375 = vmatpush2.bf16.msra.mxu0 0
    %376 = vmatprep.mubr.bf16.mxu0 0
    %377 = vmatmul.mubr.bf16.gmra.mxu0 %v339
    %v378 = vpop.f32.mrf.mxu0
    %v379 = vadd.f32 0.0, %v378
    %v380 = vpop.f32.mrf.mxu0
    %v381 = vpop.f32.mrf.mxu0
    %v382 = vadd.f32 0.0, %v381
    %v383 = vpop.f32.mrf.mxu0
    %384 = vmatprep.mubr.bf16.mxu0 0
    %385 = vmatmul.mubr.bf16.gmra.mxu0 %v342
    %v386 = vpop.f32.mrf.mxu0
    %v387 = vadd.f32 0.0, %v386
    %v388 = vpop.f32.mrf.mxu0
    %v389 = vpop.f32.mrf.mxu0
    %v390 = vadd.f32 0.0, %v389
    %v391 = vpop.f32.mrf.mxu0
    %392 = vdwg.mxu0
    %v395 = vunpack.c.l.b16 %v307
    %v396 = vunpack.c.l.b16 %v308
    %v397 = vpack.c.b16 %v396, %v395
    %v400 = vsel %vm337, %v309, 0
    %v403 = vsel %vm337, %v310, 0
    %405 = vmatprep.subr.bf16.mxu0 0
    %406 = vmatpush1.bf16.msra.mxu0 0
    %407 = vmatprep.subr.bf16.mxu0 0
    %408 = vmatpush1.bf16.msra.mxu0 0
    %409 = vmatprep.subr.bf16.mxu0 0
    %410 = vmatpush1.bf16.msra.mxu0 0
    %411 = vmatprep.subr.bf16.mxu0 0
    %412 = vmatpush1.bf16.msra.mxu0 0
    %413 = vmatprep.subr.bf16.mxu0 0
    %414 = vmatpush1.bf16.msra.mxu0 0
    %415 = vmatprep.subr.bf16.mxu0 0
    %416 = vmatpush1.bf16.msra.mxu0 0
    %417 = vmatprep.subr.bf16.mxu0 0
    %418 = vmatpush1.bf16.msra.mxu0 0
    %419 = vmatprep.subr.bf16.mxu0 0
    %420 = vmatpush1.bf16.msra.mxu0 %v397
    %421 = vmatprep.subr.bf16.mxu0 0
    %422 = vmatpush2.bf16.msra.mxu0 0
    %423 = vmatprep.subr.bf16.mxu0 0
    %424 = vmatpush2.bf16.msra.mxu0 0
    %425 = vmatprep.subr.bf16.mxu0 0
    %426 = vmatpush2.bf16.msra.mxu0 0
    %427 = vmatprep.subr.bf16.mxu0 0
    %428 = vmatpush2.bf16.msra.mxu0 0
    %429 = vmatprep.subr.bf16.mxu0 0
    %430 = vmatpush2.bf16.msra.mxu0 0
    %431 = vmatprep.subr.bf16.mxu0 0
    %432 = vmatpush2.bf16.msra.mxu0 0
    %433 = vmatprep.subr.bf16.mxu0 0
    %434 = vmatpush2.bf16.msra.mxu0 0
    %435 = vmatprep.subr.bf16.mxu0 0
    %436 = vmatpush2.bf16.msra.mxu0 0
    %437 = vmatprep.mubr.bf16.mxu0 0
    %438 = vmatmul.mubr.bf16.gmra.mxu0 %v400
    %v439 = vpop.f32.mrf.mxu0
    %v440 = vadd.f32 %v379, %v439
    %v441 = vpop.f32.mrf.mxu0
    %v442 = vpop.f32.mrf.mxu0
    %v443 = vadd.f32 %v382, %v442
    %v444 = vpop.f32.mrf.mxu0
    %445 = vmatprep.mubr.bf16.mxu0 0
    %446 = vmatmul.mubr.bf16.gmra.mxu0 %v403
    %v447 = vpop.f32.mrf.mxu0
    %v448 = vadd.f32 %v387, %v447
    %v449 = vpop.f32.mrf.mxu0
    %v450 = vpop.f32.mrf.mxu0
    %v451 = vadd.f32 %v390, %v450
    %v452 = vpop.f32.mrf.mxu0
    %453 = vdwg.mxu0
    %v454 = vrot.slane %v305, 2
    %v455 = vrot.slane %v297, 2
    %v456 = vsel %vm190, %v454, %v455
    %v457 = vrot.slane %v296, 2
    %v458 = vsel %vm190, %v455, %v457
    %v459 = vrot.slane %v306, 2
    %v460 = vrot.slane %v300, 2
    %v461 = vsel %vm190, %v459, %v460
    %v462 = vrot.slane %v299, 2
    %v463 = vsel %vm190, %v460, %v462
    %v468 = vld [vmem:[#allocation2 + $0x1c] sm:$0xf]
    %v469 = vld [vmem:[#allocation2 + $0x20] sm:$0xf]
    %v470 = vpack.c.bf16 %v458, %v456
    %v471 = vpack.c.bf16 %v463, %v461
    %v474 = vunpack.c.l.b16 %v468
    %v475 = vunpack.c.l.b16 %v469
    %v476 = vpack.c.b16 %v475, %v474
    %v479 = vsel %vm337, %v470, 0
    %v482 = vsel %vm337, %v471, 0
    %484 = vmatprep.subr.bf16.mxu0 0
    %485 = vmatpush1.bf16.msra.mxu0 0
    %486 = vmatprep.subr.bf16.mxu0 0
    %487 = vmatpush1.bf16.msra.mxu0 0
    %488 = vmatprep.subr.bf16.mxu0 0
    %489 = vmatpush1.bf16.msra.mxu0 0
    %490 = vmatprep.subr.bf16.mxu0 0
    %491 = vmatpush1.bf16.msra.mxu0 0
    %492 = vmatprep.subr.bf16.mxu0 0
    %493 = vmatpush1.bf16.msra.mxu0 0
    %494 = vmatprep.subr.bf16.mxu0 0
    %495 = vmatpush1.bf16.msra.mxu0 0
    %496 = vmatprep.subr.bf16.mxu0 0
    %497 = vmatpush1.bf16.msra.mxu0 0
    %498 = vmatprep.subr.bf16.mxu0 0
    %499 = vmatpush1.bf16.msra.mxu0 %v476
    %500 = vmatprep.subr.bf16.mxu0 0
    %501 = vmatpush2.bf16.msra.mxu0 0
    %502 = vmatprep.subr.bf16.mxu0 0
    %503 = vmatpush2.bf16.msra.mxu0 0
    %504 = vmatprep.subr.bf16.mxu0 0
    %505 = vmatpush2.bf16.msra.mxu0 0
    %506 = vmatprep.subr.bf16.mxu0 0
    %507 = vmatpush2.bf16.msra.mxu0 0
    %508 = vmatprep.subr.bf16.mxu0 0
    %509 = vmatpush2.bf16.msra.mxu0 0
    %510 = vmatprep.subr.bf16.mxu0 0
    %511 = vmatpush2.bf16.msra.mxu0 0
    %512 = vmatprep.subr.bf16.mxu0 0
    %513 = vmatpush2.bf16.msra.mxu0 0
    %514 = vmatprep.subr.bf16.mxu0 0
    %515 = vmatpush2.bf16.msra.mxu0 0
    %516 = vmatprep.mubr.bf16.mxu0 0
    %517 = vmatmul.mubr.bf16.gmra.mxu0 %v479
    %v518 = vpop.f32.mrf.mxu0
    %v519 = vadd.f32 0.0, %v518
    %v520 = vpop.f32.mrf.mxu0
    %v521 = vpop.f32.mrf.mxu0
    %v522 = vadd.f32 0.0, %v521
    %v523 = vpop.f32.mrf.mxu0
    %524 = vmatprep.mubr.bf16.mxu0 0
    %525 = vmatmul.mubr.bf16.gmra.mxu0 %v482
    %v526 = vpop.f32.mrf.mxu0
    %v527 = vadd.f32 0.0, %v526
    %v528 = vpop.f32.mrf.mxu0
    %v529 = vpop.f32.mrf.mxu0
    %v530 = vadd.f32 0.0, %v529
    %v531 = vpop.f32.mrf.mxu0
    %532 = vdwg.mxu0
    %v533 = vadd.f32 %v440, %v519
    %v534 = vadd.f32 %v443, %v522
    %v535 = vadd.f32 %v448, %v527
    %v536 = vadd.f32 %v451, %v530
    %v537 = vld [vmem:[%s2 + $0x1] sm:$0x1]
    %v538 = vlaneseq
    %v539 = vshrl.u32 %v538, 7
    %v540 = vsub.s32 0, %v539
    %v541 = vrot.slane %v537, %v540
    %v542 = vadd.f32 %v533, %v541
    %v543 = vadd.f32 %v534, %v541
    %v544 = vadd.f32 %v535, %v541
    %v545 = vadd.f32 %v536, %v541
    %vm546 = vcmp.gt.f32.partialorder %v542, 0.0
    %vm547 = vcmp.gt.f32.partialorder %v543, 0.0
    %vm548 = vcmp.gt.f32.partialorder %v544, 0.0
    %vm549 = vcmp.gt.f32.partialorder %v545, 0.0
    %v550 = vmul.f32 %v542, 0.1
    %v551 = vmul.f32 %v543, 0.1
    %v552 = vmul.f32 %v544, 0.1
    %v553 = vmul.f32 %v545, 0.1
    %v554 = vsel %vm546, %v542, %v550
    %v555 = vsel %vm547, %v543, %v551
    %v556 = vsel %vm548, %v544, %v552
    %v557 = vsel %vm549, %v545, %v553
    %v558 = vld [vmem:[#allocation2 + $0x24] sm:$0x3]
    %v559 = vpack.c.bf16 %v30, %v29
    %v560 = vpack.c.bf16 %v32, %v31
    %v561 = vld [vmem:[%s2 + $0x2] sm:$0x1]
    %v562 = vlaneseq
    %v563 = vshrl.u32 %v562, 7
    %v564 = vsub.s32 0, %v563
    %v565 = vrot.slane %v561, %v564
    %v567 = vsel %vm73, %v559, 0
    %v570 = vsel %vm73, %v560, 0
    %v573 = vsel %vm37, %v558, 0
    %575 = vmatprep.subr.bf16.mxu0 0
    %576 = vmatpush1.bf16.msra.mxu0 0
    %577 = vmatprep.subr.bf16.mxu0 0
    %578 = vmatpush1.bf16.msra.mxu0 0
    %579 = vmatprep.subr.bf16.mxu0 0
    %580 = vmatpush1.bf16.msra.mxu0 0
    %581 = vmatprep.subr.bf16.mxu0 0
    %582 = vmatpush1.bf16.msra.mxu0 0
    %583 = vmatprep.subr.bf16.mxu0 0
    %584 = vmatpush1.bf16.msra.mxu0 0
    %585 = vmatprep.subr.bf16.mxu0 0
    %586 = vmatpush1.bf16.msra.mxu0 0
    %587 = vmatprep.subr.bf16.mxu0 0
    %588 = vmatpush1.bf16.msra.mxu0 0
    %589 = vmatprep.subr.bf16.mxu0 0
    %590 = vmatpush1.bf16.msra.mxu0 %v573
    %591 = vmatprep.subr.bf16.mxu0 0
    %592 = vmatpush2.bf16.msra.mxu0 0
    %593 = vmatprep.subr.bf16.mxu0 0
    %594 = vmatpush2.bf16.msra.mxu0 0
    %595 = vmatprep.subr.bf16.mxu0 0
    %596 = vmatpush2.bf16.msra.mxu0 0
    %597 = vmatprep.subr.bf16.mxu0 0
    %598 = vmatpush2.bf16.msra.mxu0 0
    %599 = vmatprep.subr.bf16.mxu0 0
    %600 = vmatpush2.bf16.msra.mxu0 0
    %601 = vmatprep.subr.bf16.mxu0 0
    %602 = vmatpush2.bf16.msra.mxu0 0
    %603 = vmatprep.subr.bf16.mxu0 0
    %604 = vmatpush2.bf16.msra.mxu0 0
    %605 = vmatprep.subr.bf16.mxu0 0
    %606 = vmatpush2.bf16.msra.mxu0 0
    %607 = vmatprep.mubr.bf16.mxu0 0
    %608 = vmatmul.mubr.bf16.gmra.mxu0 %v567
    %v609 = vpop.f32.mrf.mxu0
    %v610 = vadd.f32 %v565, %v609
    %v611 = vpop.f32.mrf.mxu0
    %v612 = vpop.f32.mrf.mxu0
    %v613 = vadd.f32 %v565, %v612
    %v614 = vpop.f32.mrf.mxu0
    %615 = vmatprep.mubr.bf16.mxu0 0
    %616 = vmatmul.mubr.bf16.gmra.mxu0 %v570
    %v617 = vpop.f32.mrf.mxu0
    %v618 = vadd.f32 %v565, %v617
    %v619 = vpop.f32.mrf.mxu0
    %v620 = vpop.f32.mrf.mxu0
    %v621 = vadd.f32 %v565, %v620
    %v622 = vpop.f32.mrf.mxu0
    %623 = vdwg.mxu0
    %v624 = vadd.f32 %v554, %v610
    %v625 = vadd.f32 %v555, %v613
    %v626 = vadd.f32 %v556, %v618
    %v627 = vadd.f32 %v557, %v621
    %vm628 = vcmp.gt.f32.partialorder %v624, 0.0
    %vm629 = vcmp.gt.f32.partialorder %v625, 0.0
    %vm630 = vcmp.gt.f32.partialorder %v626, 0.0
    %vm631 = vcmp.gt.f32.partialorder %v627, 0.0
    %v632 = vmul.f32 %v624, 0.1
    %v633 = vmul.f32 %v625, 0.1
    %v634 = vmul.f32 %v626, 0.1
    %v635 = vmul.f32 %v627, 0.1
    %v636 = vsel %vm628, %v624, %v632
    %v637 = vsel %vm629, %v625, %v633
    %v638 = vsel %vm630, %v626, %v634
    %v639 = vsel %vm631, %v627, %v635
    %vm644 = vcmask 1043456
    %v645 = vrot.slane %v636, 4
    %v646 = vrot.slane %v637, 4
    %v647 = vsel %vm644, %v645, %v646
    %v648 = vrot.slane %v638, 4
    %v649 = vrot.slane %v639, 4
    %v650 = vsel %vm644, %v648, %v649
    %v655 = vsel %vm644, 0.0, %v645
    %v656 = vsel %vm644, 0.0, %v648
    %v657 = vld [vmem:[#allocation2 + $0x28] sm:$0xf]
    %v658 = vld [vmem:[#allocation2 + $0x2c] sm:$0xf]
    %v659 = vpack.c.bf16 %v647, %v655
    %v660 = vpack.c.bf16 %v650, %v656
    %v663 = vrot.slane %v655, 2
    %v664 = vrot.slane %v647, 2
    %v665 = vsel %vm190, %v663, %v664
    %v666 = vrot.slane %v646, 2
    %v667 = vsel %vm190, %v664, %v666
    %v668 = vrot.slane %v656, 2
    %v669 = vrot.slane %v650, 2
    %v670 = vsel %vm190, %v668, %v669
    %v671 = vrot.slane %v649, 2
    %v672 = vsel %vm190, %v669, %v671
    %v677 = vld [vmem:[#allocation2 + $0x40] sm:$0xf]
    %v678 = vld [vmem:[#allocation2 + $0x44] sm:$0xf]
    %v679 = vpack.c.bf16 %v667, %v665
    %v680 = vpack.c.bf16 %v672, %v670
    %v683 = vunpack.c.l.b16 %v677
    %v684 = vunpack.c.l.b16 %v678
    %v685 = vpack.c.b16 %v684, %v683
    %v688 = vsel %vm337, %v679, 0
    %v691 = vsel %vm337, %v680, 0
    %693 = vmatprep.subr.bf16.mxu0 0
    %694 = vmatpush1.bf16.msra.mxu0 0
    %695 = vmatprep.subr.bf16.mxu0 0
    %696 = vmatpush1.bf16.msra.mxu0 0
    %697 = vmatprep.subr.bf16.mxu0 0
    %698 = vmatpush1.bf16.msra.mxu0 0
    %699 = vmatprep.subr.bf16.mxu0 0
    %700 = vmatpush1.bf16.msra.mxu0 0
    %701 = vmatprep.subr.bf16.mxu0 0
    %702 = vmatpush1.bf16.msra.mxu0 0
    %703 = vmatprep.subr.bf16.mxu0 0
    %704 = vmatpush1.bf16.msra.mxu0 0
    %705 = vmatprep.subr.bf16.mxu0 0
    %706 = vmatpush1.bf16.msra.mxu0 0
    %707 = vmatprep.subr.bf16.mxu0 0
    %708 = vmatpush1.bf16.msra.mxu0 %v685
    %709 = vmatprep.subr.bf16.mxu0 0
    %710 = vmatpush2.bf16.msra.mxu0 0
    %711 = vmatprep.subr.bf16.mxu0 0
    %712 = vmatpush2.bf16.msra.mxu0 0
    %713 = vmatprep.subr.bf16.mxu0 0
    %714 = vmatpush2.bf16.msra.mxu0 0
    %715 = vmatprep.subr.bf16.mxu0 0
    %716 = vmatpush2.bf16.msra.mxu0 0
    %717 = vmatprep.subr.bf16.mxu0 0
    %718 = vmatpush2.bf16.msra.mxu0 0
    %719 = vmatprep.subr.bf16.mxu0 0
    %720 = vmatpush2.bf16.msra.mxu0 0
    %721 = vmatprep.subr.bf16.mxu0 0
    %722 = vmatpush2.bf16.msra.mxu0 0
    %723 = vmatprep.subr.bf16.mxu0 0
    %724 = vmatpush2.bf16.msra.mxu0 0
    %725 = vmatprep.mubr.bf16.mxu0 0
    %726 = vmatmul.mubr.bf16.gmra.mxu0 %v688
    %v727 = vpop.f32.mrf.mxu0
    %v728 = vadd.f32 0.0, %v727
    %v729 = vpop.f32.mrf.mxu0
    %v730 = vpop.f32.mrf.mxu0
    %v731 = vadd.f32 0.0, %v730
    %v732 = vpop.f32.mrf.mxu0
    %733 = vmatprep.mubr.bf16.mxu0 0
    %734 = vmatmul.mubr.bf16.gmra.mxu0 %v691
    %v735 = vpop.f32.mrf.mxu0
    %v736 = vadd.f32 0.0, %v735
    %v737 = vpop.f32.mrf.mxu0
    %v738 = vpop.f32.mrf.mxu0
    %v739 = vadd.f32 0.0, %v738
    %v740 = vpop.f32.mrf.mxu0
    %741 = vdwg.mxu0
    %v744 = vunpack.c.l.b16 %v657
    %v745 = vunpack.c.l.b16 %v658
    %v746 = vpack.c.b16 %v745, %v744
    %v749 = vsel %vm337, %v659, 0
    %v752 = vsel %vm337, %v660, 0
    %754 = vmatprep.subr.bf16.mxu0 0
    %755 = vmatpush1.bf16.msra.mxu0 0
    %756 = vmatprep.subr.bf16.mxu0 0
    %757 = vmatpush1.bf16.msra.mxu0 0
    %758 = vmatprep.subr.bf16.mxu0 0
    %759 = vmatpush1.bf16.msra.mxu0 0
    %760 = vmatprep.subr.bf16.mxu0 0
    %761 = vmatpush1.bf16.msra.mxu0 0
    %762 = vmatprep.subr.bf16.mxu0 0
    %763 = vmatpush1.bf16.msra.mxu0 0
    %764 = vmatprep.subr.bf16.mxu0 0
    %765 = vmatpush1.bf16.msra.mxu0 0
    %766 = vmatprep.subr.bf16.mxu0 0
    %767 = vmatpush1.bf16.msra.mxu0 0
    %768 = vmatprep.subr.bf16.mxu0 0
    %769 = vmatpush1.bf16.msra.mxu0 %v746
    %770 = vmatprep.subr.bf16.mxu0 0
    %771 = vmatpush2.bf16.msra.mxu0 0
    %772 = vmatprep.subr.bf16.mxu0 0
    %773 = vmatpush2.bf16.msra.mxu0 0
    %774 = vmatprep.subr.bf16.mxu0 0
    %775 = vmatpush2.bf16.msra.mxu0 0
    %776 = vmatprep.subr.bf16.mxu0 0
    %777 = vmatpush2.bf16.msra.mxu0 0
    %778 = vmatprep.subr.bf16.mxu0 0
    %779 = vmatpush2.bf16.msra.mxu0 0
    %780 = vmatprep.subr.bf16.mxu0 0
    %781 = vmatpush2.bf16.msra.mxu0 0
    %782 = vmatprep.subr.bf16.mxu0 0
    %783 = vmatpush2.bf16.msra.mxu0 0
    %784 = vmatprep.subr.bf16.mxu0 0
    %785 = vmatpush2.bf16.msra.mxu0 0
    %786 = vmatprep.mubr.bf16.mxu0 0
    %787 = vmatmul.mubr.bf16.gmra.mxu0 %v749
    %v788 = vpop.f32.mrf.mxu0
    %v789 = vadd.f32 %v728, %v788
    %v790 = vpop.f32.mrf.mxu0
    %v791 = vpop.f32.mrf.mxu0
    %v792 = vadd.f32 %v731, %v791
    %v793 = vpop.f32.mrf.mxu0
    %794 = vmatprep.mubr.bf16.mxu0 0
    %795 = vmatmul.mubr.bf16.gmra.mxu0 %v752
    %v796 = vpop.f32.mrf.mxu0
    %v797 = vadd.f32 %v736, %v796
    %v798 = vpop.f32.mrf.mxu0
    %v799 = vpop.f32.mrf.mxu0
    %v800 = vadd.f32 %v739, %v799
    %v801 = vpop.f32.mrf.mxu0
    %802 = vdwg.mxu0
    %v803 = vrot.slane %v655, 4
    %v804 = vrot.slane %v647, 4
    %v805 = vsel %vm644, %v803, %v804
    %v806 = vrot.slane %v646, 4
    %v807 = vsel %vm644, %v804, %v806
    %v808 = vrot.slane %v656, 4
    %v809 = vrot.slane %v650, 4
    %v810 = vsel %vm644, %v808, %v809
    %v811 = vrot.slane %v649, 4
    %v812 = vsel %vm644, %v809, %v811
    %v817 = vld [vmem:[#allocation2 + $0x58] sm:$0xf]
    %v818 = vld [vmem:[#allocation2 + $0x5c] sm:$0xf]
    %v819 = vpack.c.bf16 %v807, %v805
    %v820 = vpack.c.bf16 %v812, %v810
    %v823 = vunpack.c.l.b16 %v817
    %v824 = vunpack.c.l.b16 %v818
    %v825 = vpack.c.b16 %v824, %v823
    %v828 = vsel %vm337, %v819, 0
    %v831 = vsel %vm337, %v820, 0
    %833 = vmatprep.subr.bf16.mxu0 0
    %834 = vmatpush1.bf16.msra.mxu0 0
    %835 = vmatprep.subr.bf16.mxu0 0
    %836 = vmatpush1.bf16.msra.mxu0 0
    %837 = vmatprep.subr.bf16.mxu0 0
    %838 = vmatpush1.bf16.msra.mxu0 0
    %839 = vmatprep.subr.bf16.mxu0 0
    %840 = vmatpush1.bf16.msra.mxu0 0
    %841 = vmatprep.subr.bf16.mxu0 0
    %842 = vmatpush1.bf16.msra.mxu0 0
    %843 = vmatprep.subr.bf16.mxu0 0
    %844 = vmatpush1.bf16.msra.mxu0 0
    %845 = vmatprep.subr.bf16.mxu0 0
    %846 = vmatpush1.bf16.msra.mxu0 0
    %847 = vmatprep.subr.bf16.mxu0 0
    %848 = vmatpush1.bf16.msra.mxu0 %v825
    %849 = vmatprep.subr.bf16.mxu0 0
    %850 = vmatpush2.bf16.msra.mxu0 0
    %851 = vmatprep.subr.bf16.mxu0 0
    %852 = vmatpush2.bf16.msra.mxu0 0
    %853 = vmatprep.subr.bf16.mxu0 0
    %854 = vmatpush2.bf16.msra.mxu0 0
    %855 = vmatprep.subr.bf16.mxu0 0
    %856 = vmatpush2.bf16.msra.mxu0 0
    %857 = vmatprep.subr.bf16.mxu0 0
    %858 = vmatpush2.bf16.msra.mxu0 0
    %859 = vmatprep.subr.bf16.mxu0 0
    %860 = vmatpush2.bf16.msra.mxu0 0
    %861 = vmatprep.subr.bf16.mxu0 0
    %862 = vmatpush2.bf16.msra.mxu0 0
    %863 = vmatprep.subr.bf16.mxu0 0
    %864 = vmatpush2.bf16.msra.mxu0 0
    %865 = vmatprep.mubr.bf16.mxu0 0
    %866 = vmatmul.mubr.bf16.gmra.mxu0 %v828
    %v867 = vpop.f32.mrf.mxu0
    %v868 = vadd.f32 0.0, %v867
    %v869 = vpop.f32.mrf.mxu0
    %v870 = vpop.f32.mrf.mxu0
    %v871 = vadd.f32 0.0, %v870
    %v872 = vpop.f32.mrf.mxu0
    %873 = vmatprep.mubr.bf16.mxu0 0
    %874 = vmatmul.mubr.bf16.gmra.mxu0 %v831
    %v875 = vpop.f32.mrf.mxu0
    %v876 = vadd.f32 0.0, %v875
    %v877 = vpop.f32.mrf.mxu0
    %v878 = vpop.f32.mrf.mxu0
    %v879 = vadd.f32 0.0, %v878
    %v880 = vpop.f32.mrf.mxu0
    %881 = vdwg.mxu0
    %v882 = vadd.f32 %v789, %v868
    %v883 = vadd.f32 %v792, %v871
    %v884 = vadd.f32 %v797, %v876
    %v885 = vadd.f32 %v800, %v879
    %v886 = vld [vmem:[%s2 + $0x3] sm:$0x1]
    %v887 = vlaneseq
    %v888 = vshrl.u32 %v887, 7
    %v889 = vsub.s32 0, %v888
    %v890 = vrot.slane %v886, %v889
    %v891 = vadd.f32 %v882, %v890
    %v892 = vadd.f32 %v883, %v890
    %v893 = vadd.f32 %v884, %v890
    %v894 = vadd.f32 %v885, %v890
    %vm895 = vcmp.gt.f32.partialorder %v891, 0.0
    %vm896 = vcmp.gt.f32.partialorder %v892, 0.0
    %vm897 = vcmp.gt.f32.partialorder %v893, 0.0
    %vm898 = vcmp.gt.f32.partialorder %v894, 0.0
    %v899 = vmul.f32 %v891, 0.1
    %v900 = vmul.f32 %v892, 0.1
    %v901 = vmul.f32 %v893, 0.1
    %v902 = vmul.f32 %v894, 0.1
    %v903 = vsel %vm895, %v891, %v899
    %v904 = vsel %vm896, %v892, %v900
    %v905 = vsel %vm897, %v893, %v901
    %v906 = vsel %vm898, %v894, %v902
    %v911 = vrot.slane %v903, 4
    %v912 = vrot.slane %v904, 4
    %v913 = vsel %vm644, %v911, %v912
    %v914 = vrot.slane %v905, 4
    %v915 = vrot.slane %v906, 4
    %v916 = vsel %vm644, %v914, %v915
    %v921 = vsel %vm644, 0.0, %v911
    %v922 = vsel %vm644, 0.0, %v914
    %v923 = vld [vmem:[#allocation2 + $0x30] sm:$0xf]
    %v924 = vld [vmem:[#allocation2 + $0x34] sm:$0xf]
    %v925 = vld [vmem:[#allocation2 + $0x38] sm:$0xf]
    %v926 = vld [vmem:[#allocation2 + $0x3c] sm:$0xf]
    %v927 = vpack.c.bf16 %v913, %v921
    %v928 = vpack.c.bf16 %v916, %v922
    %v931 = vrot.slane %v921, 2
    %v932 = vrot.slane %v913, 2
    %v933 = vsel %vm190, %v931, %v932
    %v934 = vrot.slane %v912, 2
    %v935 = vsel %vm190, %v932, %v934
    %v936 = vrot.slane %v922, 2
    %v937 = vrot.slane %v916, 2
    %v938 = vsel %vm190, %v936, %v937
    %v939 = vrot.slane %v915, 2
    %v940 = vsel %vm190, %v937, %v939
    %v945 = vld [vmem:[#allocation2 + $0x48] sm:$0xf]
    %v946 = vld [vmem:[#allocation2 + $0x4c] sm:$0xf]
    %v947 = vld [vmem:[#allocation2 + $0x50] sm:$0xf]
    %v948 = vld [vmem:[#allocation2 + $0x54] sm:$0xf]
    %v949 = vpack.c.bf16 %v935, %v933
    %v950 = vpack.c.bf16 %v940, %v938
    %v955 = vunpack.c.l.b16 %v945
    %v956 = vunpack.c.l.b16 %v946
    %v957 = vunpack.c.l.b16 %v947
    %v958 = vunpack.c.l.b16 %v948
    %v959 = vpack.c.b16 %v956, %v955
    %v960 = vpack.c.b16 %v958, %v957
    %vm963 = vcmask 261120
    %v965 = vsel %vm963, %v949, 0
    %v968 = vsel %vm963, %v950, 0
    %970 = vmatprep.subr.bf16.mxu0 0
    %971 = vmatpush1.bf16.msra.mxu0 0
    %972 = vmatprep.subr.bf16.mxu0 0
    %973 = vmatpush1.bf16.msra.mxu0 0
    %974 = vmatprep.subr.bf16.mxu0 0
    %975 = vmatpush1.bf16.msra.mxu0 0
    %976 = vmatprep.subr.bf16.mxu0 0
    %977 = vmatpush1.bf16.msra.mxu0 0
    %978 = vmatprep.subr.bf16.mxu0 0
    %979 = vmatpush1.bf16.msra.mxu0 0
    %980 = vmatprep.subr.bf16.mxu0 0
    %981 = vmatpush1.bf16.msra.mxu0 0
    %982 = vmatprep.subr.bf16.mxu0 0
    %983 = vmatpush1.bf16.msra.mxu0 %v960
    %984 = vmatprep.subr.bf16.mxu0 0
    %985 = vmatpush1.bf16.msra.mxu0 %v959
    %986 = vmatprep.subr.bf16.mxu0 0
    %987 = vmatpush2.bf16.msra.mxu0 0
    %988 = vmatprep.subr.bf16.mxu0 0
    %989 = vmatpush2.bf16.msra.mxu0 0
    %990 = vmatprep.subr.bf16.mxu0 0
    %991 = vmatpush2.bf16.msra.mxu0 0
    %992 = vmatprep.subr.bf16.mxu0 0
    %993 = vmatpush2.bf16.msra.mxu0 0
    %994 = vmatprep.subr.bf16.mxu0 0
    %995 = vmatpush2.bf16.msra.mxu0 0
    %996 = vmatprep.subr.bf16.mxu0 0
    %997 = vmatpush2.bf16.msra.mxu0 0
    %998 = vmatprep.subr.bf16.mxu0 0
    %999 = vmatpush2.bf16.msra.mxu0 0
    %1000 = vmatprep.subr.bf16.mxu0 0
    %1001 = vmatpush2.bf16.msra.mxu0 0
    %1002 = vmatprep.mubr.bf16.mxu0 0
    %1003 = vmatmul.mubr.bf16.gmra.mxu0 %v965
    %v1004 = vpop.f32.mrf.mxu0
    %v1005 = vadd.f32 0.0, %v1004
    %v1006 = vpop.f32.mrf.mxu0
    %v1007 = vpop.f32.mrf.mxu0
    %v1008 = vadd.f32 0.0, %v1007
    %v1009 = vpop.f32.mrf.mxu0
    %1010 = vmatprep.mubr.bf16.mxu0 0
    %1011 = vmatmul.mubr.bf16.gmra.mxu0 %v968
    %v1012 = vpop.f32.mrf.mxu0
    %v1013 = vadd.f32 0.0, %v1012
    %v1014 = vpop.f32.mrf.mxu0
    %v1015 = vpop.f32.mrf.mxu0
    %v1016 = vadd.f32 0.0, %v1015
    %v1017 = vpop.f32.mrf.mxu0
    %1018 = vdwg.mxu0
    %v1023 = vunpack.c.l.b16 %v923
    %v1024 = vunpack.c.l.b16 %v924
    %v1025 = vunpack.c.l.b16 %v925
    %v1026 = vunpack.c.l.b16 %v926
    %v1027 = vpack.c.b16 %v1024, %v1023
    %v1028 = vpack.c.b16 %v1026, %v1025
    %v1032 = vsel %vm963, %v927, 0
    %v1035 = vsel %vm963, %v928, 0
    %1037 = vmatprep.subr.bf16.mxu0 0
    %1038 = vmatpush1.bf16.msra.mxu0 0
    %1039 = vmatprep.subr.bf16.mxu0 0
    %1040 = vmatpush1.bf16.msra.mxu0 0
    %1041 = vmatprep.subr.bf16.mxu0 0
    %1042 = vmatpush1.bf16.msra.mxu0 0
    %1043 = vmatprep.subr.bf16.mxu0 0
    %1044 = vmatpush1.bf16.msra.mxu0 0
    %1045 = vmatprep.subr.bf16.mxu0 0
    %1046 = vmatpush1.bf16.msra.mxu0 0
    %1047 = vmatprep.subr.bf16.mxu0 0
    %1048 = vmatpush1.bf16.msra.mxu0 0
    %1049 = vmatprep.subr.bf16.mxu0 0
    %1050 = vmatpush1.bf16.msra.mxu0 %v1028
    %1051 = vmatprep.subr.bf16.mxu0 0
    %1052 = vmatpush1.bf16.msra.mxu0 %v1027
    %1053 = vmatprep.subr.bf16.mxu0 0
    %1054 = vmatpush2.bf16.msra.mxu0 0
    %1055 = vmatprep.subr.bf16.mxu0 0
    %1056 = vmatpush2.bf16.msra.mxu0 0
    %1057 = vmatprep.subr.bf16.mxu0 0
    %1058 = vmatpush2.bf16.msra.mxu0 0
    %1059 = vmatprep.subr.bf16.mxu0 0
    %1060 = vmatpush2.bf16.msra.mxu0 0
    %1061 = vmatprep.subr.bf16.mxu0 0
    %1062 = vmatpush2.bf16.msra.mxu0 0
    %1063 = vmatprep.subr.bf16.mxu0 0
    %1064 = vmatpush2.bf16.msra.mxu0 0
    %1065 = vmatprep.subr.bf16.mxu0 0
    %1066 = vmatpush2.bf16.msra.mxu0 0
    %1067 = vmatprep.subr.bf16.mxu0 0
    %1068 = vmatpush2.bf16.msra.mxu0 0
    %1069 = vmatprep.mubr.bf16.mxu0 0
    %1070 = vmatmul.mubr.bf16.gmra.mxu0 %v1032
    %v1071 = vpop.f32.mrf.mxu0
    %v1072 = vadd.f32 %v1005, %v1071
    %v1073 = vpop.f32.mrf.mxu0
    %v1074 = vpop.f32.mrf.mxu0
    %v1075 = vadd.f32 %v1008, %v1074
    %v1076 = vpop.f32.mrf.mxu0
    %1077 = vmatprep.mubr.bf16.mxu0 0
    %1078 = vmatmul.mubr.bf16.gmra.mxu0 %v1035
    %v1079 = vpop.f32.mrf.mxu0
    %v1080 = vadd.f32 %v1013, %v1079
    %v1081 = vpop.f32.mrf.mxu0
    %v1082 = vpop.f32.mrf.mxu0
    %v1083 = vadd.f32 %v1016, %v1082
    %v1084 = vpop.f32.mrf.mxu0
    %1085 = vdwg.mxu0
    %v1086 = vrot.slane %v921, 4
    %v1087 = vrot.slane %v913, 4
    %v1088 = vsel %vm644, %v1086, %v1087
    %v1089 = vrot.slane %v912, 4
    %v1090 = vsel %vm644, %v1087, %v1089
    %v1091 = vrot.slane %v922, 4
    %v1092 = vrot.slane %v916, 4
    %v1093 = vsel %vm644, %v1091, %v1092
    %v1094 = vrot.slane %v915, 4
    %v1095 = vsel %vm644, %v1092, %v1094
    %v1100 = vld [vmem:[#allocation2 + $0x60] sm:$0xf]
    %v1101 = vld [vmem:[#allocation2 + $0x64] sm:$0xf]
    %v1102 = vld [vmem:[#allocation2 + $0x68] sm:$0xf]
    %v1103 = vld [vmem:[#allocation2 + $0x6c] sm:$0xf]
    %v1104 = vpack.c.bf16 %v1090, %v1088
    %v1105 = vpack.c.bf16 %v1095, %v1093
    %v1110 = vunpack.c.l.b16 %v1100
    %v1111 = vunpack.c.l.b16 %v1101
    %v1112 = vunpack.c.l.b16 %v1102
    %v1113 = vunpack.c.l.b16 %v1103
    %v1114 = vpack.c.b16 %v1111, %v1110
    %v1115 = vpack.c.b16 %v1113, %v1112
    %v1119 = vsel %vm963, %v1104, 0
    %v1122 = vsel %vm963, %v1105, 0
    %1124 = vmatprep.subr.bf16.mxu0 0
    %1125 = vmatpush1.bf16.msra.mxu0 0
    %1126 = vmatprep.subr.bf16.mxu0 0
    %1127 = vmatpush1.bf16.msra.mxu0 0
    %1128 = vmatprep.subr.bf16.mxu0 0
    %1129 = vmatpush1.bf16.msra.mxu0 0
    %1130 = vmatprep.subr.bf16.mxu0 0
    %1131 = vmatpush1.bf16.msra.mxu0 0
    %1132 = vmatprep.subr.bf16.mxu0 0
    %1133 = vmatpush1.bf16.msra.mxu0 0
    %1134 = vmatprep.subr.bf16.mxu0 0
    %1135 = vmatpush1.bf16.msra.mxu0 0
    %1136 = vmatprep.subr.bf16.mxu0 0
    %1137 = vmatpush1.bf16.msra.mxu0 %v1115
    %1138 = vmatprep.subr.bf16.mxu0 0
    %1139 = vmatpush1.bf16.msra.mxu0 %v1114
    %1140 = vmatprep.subr.bf16.mxu0 0
    %1141 = vmatpush2.bf16.msra.mxu0 0
    %1142 = vmatprep.subr.bf16.mxu0 0
    %1143 = vmatpush2.bf16.msra.mxu0 0
    %1144 = vmatprep.subr.bf16.mxu0 0
    %1145 = vmatpush2.bf16.msra.mxu0 0
    %1146 = vmatprep.subr.bf16.mxu0 0
    %1147 = vmatpush2.bf16.msra.mxu0 0
    %1148 = vmatprep.subr.bf16.mxu0 0
    %1149 = vmatpush2.bf16.msra.mxu0 0
    %1150 = vmatprep.subr.bf16.mxu0 0
    %1151 = vmatpush2.bf16.msra.mxu0 0
    %1152 = vmatprep.subr.bf16.mxu0 0
    %1153 = vmatpush2.bf16.msra.mxu0 0
    %1154 = vmatprep.subr.bf16.mxu0 0
    %1155 = vmatpush2.bf16.msra.mxu0 0
    %1156 = vmatprep.mubr.bf16.mxu0 0
    %1157 = vmatmul.mubr.bf16.gmra.mxu0 %v1119
    %v1158 = vpop.f32.mrf.mxu0
    %v1159 = vadd.f32 0.0, %v1158
    %v1160 = vpop.f32.mrf.mxu0
    %v1161 = vpop.f32.mrf.mxu0
    %v1162 = vadd.f32 0.0, %v1161
    %v1163 = vpop.f32.mrf.mxu0
    %1164 = vmatprep.mubr.bf16.mxu0 0
    %1165 = vmatmul.mubr.bf16.gmra.mxu0 %v1122
    %v1166 = vpop.f32.mrf.mxu0
    %v1167 = vadd.f32 0.0, %v1166
    %v1168 = vpop.f32.mrf.mxu0
    %v1169 = vpop.f32.mrf.mxu0
    %v1170 = vadd.f32 0.0, %v1169
    %v1171 = vpop.f32.mrf.mxu0
    %1172 = vdwg.mxu0
    %v1173 = vadd.f32 %v1072, %v1159
    %v1174 = vadd.f32 %v1075, %v1162
    %v1175 = vadd.f32 %v1080, %v1167
    %v1176 = vadd.f32 %v1083, %v1170
    %v1177 = vld [vmem:[%s2 + $0x4] sm:$0x1]
    %v1178 = vlaneseq
    %v1179 = vshrl.u32 %v1178, 7
    %v1180 = vsub.s32 0, %v1179
    %v1181 = vrot.slane %v1177, %v1180
    %v1182 = vadd.f32 %v1173, %v1181
    %v1183 = vadd.f32 %v1174, %v1181
    %v1184 = vadd.f32 %v1175, %v1181
    %v1185 = vadd.f32 %v1176, %v1181
    %vm1186 = vcmp.gt.f32.partialorder %v1182, 0.0
    %vm1187 = vcmp.gt.f32.partialorder %v1183, 0.0
    %vm1188 = vcmp.gt.f32.partialorder %v1184, 0.0
    %vm1189 = vcmp.gt.f32.partialorder %v1185, 0.0
    %v1190 = vmul.f32 %v1182, 0.1
    %v1191 = vmul.f32 %v1183, 0.1
    %v1192 = vmul.f32 %v1184, 0.1
    %v1193 = vmul.f32 %v1185, 0.1
    %v1194 = vsel %vm1186, %v1182, %v1190
    %v1195 = vsel %vm1187, %v1183, %v1191
    %v1196 = vsel %vm1188, %v1184, %v1192
    %v1197 = vsel %vm1189, %v1185, %v1193
    %v1198 = vld [vmem:[#allocation2 + $0x70] sm:$0xf]
    %v1199 = vld [vmem:[#allocation2 + $0x74] sm:$0xf]
    %v1200 = vpack.c.bf16 %v637, %v636
    %v1201 = vpack.c.bf16 %v639, %v638
    %v1202 = vld [vmem:[%s2 + $0x5] sm:$0x1]
    %v1203 = vlaneseq
    %v1204 = vshrl.u32 %v1203, 7
    %v1205 = vsub.s32 0, %v1204
    %v1206 = vrot.slane %v1202, %v1205
    %v1209 = vunpack.c.l.b16 %v1198
    %v1210 = vunpack.c.l.b16 %v1199
    %v1211 = vpack.c.b16 %v1210, %v1209
    %v1214 = vsel %vm337, %v1200, 0
    %v1217 = vsel %vm337, %v1201, 0
    %1219 = vmatprep.subr.bf16.mxu0 0
    %1220 = vmatpush1.bf16.msra.mxu0 0
    %1221 = vmatprep.subr.bf16.mxu0 0
    %1222 = vmatpush1.bf16.msra.mxu0 0
    %1223 = vmatprep.subr.bf16.mxu0 0
    %1224 = vmatpush1.bf16.msra.mxu0 0
    %1225 = vmatprep.subr.bf16.mxu0 0
    %1226 = vmatpush1.bf16.msra.mxu0 0
    %1227 = vmatprep.subr.bf16.mxu0 0
    %1228 = vmatpush1.bf16.msra.mxu0 0
    %1229 = vmatprep.subr.bf16.mxu0 0
    %1230 = vmatpush1.bf16.msra.mxu0 0
    %1231 = vmatprep.subr.bf16.mxu0 0
    %1232 = vmatpush1.bf16.msra.mxu0 0
    %1233 = vmatprep.subr.bf16.mxu0 0
    %1234 = vmatpush1.bf16.msra.mxu0 %v1211
    %1235 = vmatprep.subr.bf16.mxu0 0
    %1236 = vmatpush2.bf16.msra.mxu0 0
    %1237 = vmatprep.subr.bf16.mxu0 0
    %1238 = vmatpush2.bf16.msra.mxu0 0
    %1239 = vmatprep.subr.bf16.mxu0 0
    %1240 = vmatpush2.bf16.msra.mxu0 0
    %1241 = vmatprep.subr.bf16.mxu0 0
    %1242 = vmatpush2.bf16.msra.mxu0 0
    %1243 = vmatprep.subr.bf16.mxu0 0
    %1244 = vmatpush2.bf16.msra.mxu0 0
    %1245 = vmatprep.subr.bf16.mxu0 0
    %1246 = vmatpush2.bf16.msra.mxu0 0
    %1247 = vmatprep.subr.bf16.mxu0 0
    %1248 = vmatpush2.bf16.msra.mxu0 0
    %1249 = vmatprep.subr.bf16.mxu0 0
    %1250 = vmatpush2.bf16.msra.mxu0 0
    %1251 = vmatprep.mubr.bf16.mxu0 0
    %1252 = vmatmul.mubr.bf16.gmra.mxu0 %v1214
    %v1253 = vpop.f32.mrf.mxu0
    %v1254 = vadd.f32 %v1206, %v1253
    %v1255 = vpop.f32.mrf.mxu0
    %v1256 = vpop.f32.mrf.mxu0
    %v1257 = vadd.f32 %v1206, %v1256
    %v1258 = vpop.f32.mrf.mxu0
    %1259 = vmatprep.mubr.bf16.mxu0 0
    %1260 = vmatmul.mubr.bf16.gmra.mxu0 %v1217
    %v1261 = vpop.f32.mrf.mxu0
    %v1262 = vadd.f32 %v1206, %v1261
    %v1263 = vpop.f32.mrf.mxu0
    %v1264 = vpop.f32.mrf.mxu0
    %v1265 = vadd.f32 %v1206, %v1264
    %v1266 = vpop.f32.mrf.mxu0
    %1267 = vdwg.mxu0
    %v1268 = vadd.f32 %v1194, %v1254
    %v1269 = vadd.f32 %v1195, %v1257
    %v1270 = vadd.f32 %v1196, %v1262
    %v1271 = vadd.f32 %v1197, %v1265
    %vm1272 = vcmp.gt.f32.partialorder %v1268, 0.0
    %vm1273 = vcmp.gt.f32.partialorder %v1269, 0.0
    %vm1274 = vcmp.gt.f32.partialorder %v1270, 0.0
    %vm1275 = vcmp.gt.f32.partialorder %v1271, 0.0
    %v1276 = vmul.f32 %v1268, 0.1
    %v1277 = vmul.f32 %v1269, 0.1
    %v1278 = vmul.f32 %v1270, 0.1
    %v1279 = vmul.f32 %v1271, 0.1
    %v1280 = vsel %vm1272, %v1268, %v1276
    %v1281 = vsel %vm1273, %v1269, %v1277
    %v1282 = vsel %vm1274, %v1270, %v1278
    %v1283 = vsel %vm1275, %v1271, %v1279
    %v1284 = vld [vmem:[#allocation2 + $0x78] sm:$0xf]
    %v1285 = vld [vmem:[#allocation2 + $0x7c] sm:$0xf]
    %v1286 = vld [vmem:[#allocation2 + $0x80] sm:$0xf]
    %v1287 = vld [vmem:[#allocation2 + $0x84] sm:$0xf]
    %v1288 = vpack.c.bf16 %v1281, %v1280
    %v1289 = vpack.c.bf16 %v1283, %v1282
    %v1290 = vld [vmem:[%s2 + $0x6] sm:$0x1]
    %v1291 = vlaneseq
    %v1292 = vshrl.u32 %v1291, 7
    %v1293 = vsub.s32 0, %v1292
    %v1294 = vrot.slane %v1290, %v1293
    %v1299 = vunpack.c.l.b16 %v1284
    %v1300 = vunpack.c.l.b16 %v1285
    %v1301 = vunpack.c.l.b16 %v1286
    %v1302 = vunpack.c.l.b16 %v1287
    %v1303 = vpack.c.b16 %v1300, %v1299
    %v1304 = vpack.c.b16 %v1302, %v1301
    %v1308 = vsel %vm963, %v1288, 0
    %v1311 = vsel %vm963, %v1289, 0
    %1313 = vmatprep.subr.bf16.mxu0 0
    %1314 = vmatpush1.bf16.msra.mxu0 0
    %1315 = vmatprep.subr.bf16.mxu0 0
    %1316 = vmatpush1.bf16.msra.mxu0 0
    %1317 = vmatprep.subr.bf16.mxu0 0
    %1318 = vmatpush1.bf16.msra.mxu0 0
    %1319 = vmatprep.subr.bf16.mxu0 0
    %1320 = vmatpush1.bf16.msra.mxu0 0
    %1321 = vmatprep.subr.bf16.mxu0 0
    %1322 = vmatpush1.bf16.msra.mxu0 0
    %1323 = vmatprep.subr.bf16.mxu0 0
    %1324 = vmatpush1.bf16.msra.mxu0 0
    %1325 = vmatprep.subr.bf16.mxu0 0
    %1326 = vmatpush1.bf16.msra.mxu0 %v1304
    %1327 = vmatprep.subr.bf16.mxu0 0
    %1328 = vmatpush1.bf16.msra.mxu0 %v1303
    %1329 = vmatprep.subr.bf16.mxu0 0
    %1330 = vmatpush2.bf16.msra.mxu0 0
    %1331 = vmatprep.subr.bf16.mxu0 0
    %1332 = vmatpush2.bf16.msra.mxu0 0
    %1333 = vmatprep.subr.bf16.mxu0 0
    %1334 = vmatpush2.bf16.msra.mxu0 0
    %1335 = vmatprep.subr.bf16.mxu0 0
    %1336 = vmatpush2.bf16.msra.mxu0 0
    %1337 = vmatprep.subr.bf16.mxu0 0
    %1338 = vmatpush2.bf16.msra.mxu0 0
    %1339 = vmatprep.subr.bf16.mxu0 0
    %1340 = vmatpush2.bf16.msra.mxu0 0
    %1341 = vmatprep.subr.bf16.mxu0 0
    %1342 = vmatpush2.bf16.msra.mxu0 0
    %1343 = vmatprep.subr.bf16.mxu0 0
    %1344 = vmatpush2.bf16.msra.mxu0 0
    %1345 = vmatprep.mubr.bf16.mxu0 0
    %1346 = vmatmul.mubr.bf16.gmra.mxu0 %v1308
    %v1347 = vpop.f32.mrf.mxu0
    %v1348 = vadd.f32 %v1294, %v1347
    %v1349 = vpop.f32.mrf.mxu0
    %v1350 = vpop.f32.mrf.mxu0
    %v1351 = vadd.f32 %v1294, %v1350
    %v1352 = vpop.f32.mrf.mxu0
    %1353 = vmatprep.mubr.bf16.mxu0 0
    %1354 = vmatmul.mubr.bf16.gmra.mxu0 %v1311
    %v1355 = vpop.f32.mrf.mxu0
    %v1356 = vadd.f32 %v1294, %v1355
    %v1357 = vpop.f32.mrf.mxu0
    %v1358 = vpop.f32.mrf.mxu0
    %v1359 = vadd.f32 %v1294, %v1358
    %v1360 = vpop.f32.mrf.mxu0
    %1361 = vdwg.mxu0
    %v1362 = vld [vmem:[#allocation2 + $0x88] sm:$0xf]
    %v1363 = vld [vmem:[#allocation2 + $0x8c] sm:$0xf]
    %v1364 = vld [vmem:[#allocation2 + $0x90] sm:$0xf]
    %v1365 = vld [vmem:[#allocation2 + $0x94] sm:$0xf]
    %v1366 = vpack.c.bf16 %v1281, %v1281
    %v1367 = vpack.c.bf16 %v1283, %v1283
    %v1368 = vld [vmem:[%s2 + $0x7] sm:$0x1]
    %v1369 = vlaneseq
    %v1370 = vshrl.u32 %v1369, 7
    %v1371 = vsub.s32 0, %v1370
    %v1372 = vrot.slane %v1368, %v1371
    %v1375 = vunpack.c.l.b16 %v1366
    %v1376 = vunpack.c.l.b16 %v1367
    %v1377 = vrot.slane %v1375, 7
    %v1378 = vrot.slane %v1376, 6
    %vm1379 = vcmask 1041409
    %v1380 = vsel %vm1379, %v1378, %v1377
    %v1381 = vpack.c.b16 %v1380, %v1380
    %v1386 = vunpack.c.l.b16 %v1362
    %v1387 = vunpack.c.l.b16 %v1363
    %v1388 = vunpack.c.l.b16 %v1364
    %v1389 = vunpack.c.l.b16 %v1365
    %v1390 = vpack.c.b16 %v1387, %v1386
    %v1391 = vpack.c.b16 %v1389, %v1388
    %v1395 = vsel %vm963, %v1381, 0
    %1397 = vmatprep.subr.bf16.mxu0 0
    %1398 = vmatpush1.bf16.msra.mxu0 0
    %1399 = vmatprep.subr.bf16.mxu0 0
    %1400 = vmatpush1.bf16.msra.mxu0 0
    %1401 = vmatprep.subr.bf16.mxu0 0
    %1402 = vmatpush1.bf16.msra.mxu0 0
    %1403 = vmatprep.subr.bf16.mxu0 0
    %1404 = vmatpush1.bf16.msra.mxu0 0
    %1405 = vmatprep.subr.bf16.mxu0 0
    %1406 = vmatpush1.bf16.msra.mxu0 0
    %1407 = vmatprep.subr.bf16.mxu0 0
    %1408 = vmatpush1.bf16.msra.mxu0 0
    %1409 = vmatprep.subr.bf16.mxu0 0
    %1410 = vmatpush1.bf16.msra.mxu0 %v1391
    %1411 = vmatprep.subr.bf16.mxu0 0
    %1412 = vmatpush1.bf16.msra.mxu0 %v1390
    %1413 = vmatprep.subr.bf16.mxu0 0
    %1414 = vmatpush2.bf16.msra.mxu0 0
    %1415 = vmatprep.subr.bf16.mxu0 0
    %1416 = vmatpush2.bf16.msra.mxu0 0
    %1417 = vmatprep.subr.bf16.mxu0 0
    %1418 = vmatpush2.bf16.msra.mxu0 0
    %1419 = vmatprep.subr.bf16.mxu0 0
    %1420 = vmatpush2.bf16.msra.mxu0 0
    %1421 = vmatprep.subr.bf16.mxu0 0
    %1422 = vmatpush2.bf16.msra.mxu0 0
    %1423 = vmatprep.subr.bf16.mxu0 0
    %1424 = vmatpush2.bf16.msra.mxu0 0
    %1425 = vmatprep.subr.bf16.mxu0 0
    %1426 = vmatpush2.bf16.msra.mxu0 0
    %1427 = vmatprep.subr.bf16.mxu0 0
    %1428 = vmatpush2.bf16.msra.mxu0 0
    %1429 = vmatprep.mubr.bf16.mxu0 0
    %1430 = vmatmul.mubr.bf16.gmra.mxu0 %v1395
    %v1431 = vpop.f32.mrf.mxu0
    %v1432 = vadd.f32 %v1372, %v1431
    %v1433 = vpop.f32.mrf.mxu0
    %v1434 = vpop.f32.mrf.mxu0
    %v1435 = vpop.f32.mrf.mxu0
    %1436 = vdwg.mxu0
    %v1439 = vunpack.c.l.s4 1966171168
    %v1440 = vunpack.c.0.s8 %v1439
    %v1441 = vlaneseq
    %v1442 = vshrl.u32 %v1441, 7
    %v1443 = vsub.s32 %v1440, %v1442
    %v1444 = vrot.slane %v1432, %v1443
    %v1445 = vcombine.high %v1444, %v1444
    %v1447 = vunpack.c.l.s4 1966171168
    %v1448 = vunpack.c.0.s8 %v1447
    %v1449 = vlaneseq
    %v1450 = vshrl.u32 %v1449, 7
    %v1451 = vsub.s32 %v1448, %v1450
    %v1452 = vrot.slane %v1444, %v1451
    %v1454 = vunpack.c.l.s4 1966171168
    %v1455 = vunpack.c.0.s8 %v1454
    %v1456 = vlaneseq
    %v1457 = vshrl.u32 %v1456, 7
    %v1458 = vsub.s32 %v1455, %v1457
    %v1459 = vrot.slane %v1445, %v1458
    %v1460 = vlaneseq
    %v1461 = vshrl.u32 %v1460, 7
    %v1462 = vsub.s32 0, %v1461
    %v1463 = vrot.slane %v1452, %v1462
    %v1464 = vlaneseq
    %v1465 = vshrl.u32 %v1464, 7
    %v1466 = vsub.s32 0, %v1465
    %v1467 = vrot.slane %v1459, %v1466
    %1474 = vrot.lane.b32.xlu0 %v1348, 96
    %v1475 = vpop.permute.xlu0 %1474
    %1476 = vrot.lane.b32.xlu0 %v1351, 96
    %v1477 = vpop.permute.xlu0 %1476
    %1478 = vrot.lane.b32.xlu0 %v1356, 96
    %v1479 = vpop.permute.xlu0 %1478
    %1480 = vrot.lane.b32.xlu0 %v1359, 96
    %v1481 = vpop.permute.xlu0 %1480
    %v1486 = vmul.f32 %v1463, %v1475
    %v1487 = vmul.f32 %v1463, %v1477
    %v1488 = vmul.f32 %v1467, %v1479
    %v1489 = vmul.f32 %v1467, %v1481
    %v1490 = vsel %vm73, %v1486, 0.0
    %1491 = vadd.xlane.f32.xlu0 %v1490
    %v1492 = vpop.xlane.xlu0 %1491
    %v1493 = vsel %vm73, %v1487, 0.0
    %1494 = vadd.xlane.f32.xlu0 %v1493
    %v1495 = vpop.xlane.xlu0 %1494
    %v1496 = vsel %vm73, %v1488, 0.0
    %1497 = vadd.xlane.f32.xlu0 %v1496
    %v1498 = vpop.xlane.xlu0 %1497
    %v1499 = vsel %vm73, %v1489, 0.0
    %1500 = vadd.xlane.f32.xlu0 %v1499
    %v1501 = vpop.xlane.xlu0 %1500
    %v1506 = vlaneseq
    %v1507 = vand.u32 %v1506, 127
    %v1508 = vlaneseq
    %v1509 = vshrl.u32 %v1508, 7
    %v1510 = vsub.s32 %v1507, %v1509
    %v1511 = vrot.slane %v1492, %v1510
    %v1512 = vadd.s32 %v1507, 4294967288
    %v1513 = vlaneseq
    %v1514 = vshrl.u32 %v1513, 7
    %v1515 = vsub.s32 %v1512, %v1514
    %v1516 = vrot.slane %v1495, %v1515
    %vm1517 = vcmask 130112
    %v1518 = vsel %vm1517, %v1516, %v1511
    %v1519 = vlaneseq
    %v1520 = vshrl.u32 %v1519, 7
    %v1521 = vsub.s32 %v1507, %v1520
    %v1522 = vrot.slane %v1498, %v1521
    %v1523 = vlaneseq
    %v1524 = vshrl.u32 %v1523, 7
    %v1525 = vsub.s32 %v1512, %v1524
    %v1526 = vrot.slane %v1501, %v1525
    %v1527 = vsel %vm1517, %v1526, %v1522
    %v1528 = vsel %vm1379, %v1527, %v1518
    %vm1530 = vcmask 123904
    %v1531 = vsel %vm1530, %v1528, -inf
    %1532 = vmax.xlane.f32.xlu0 %v1531
    %v1533 = vpop.xlane.xlu0 %1532
    %v1535 = vlaneseq
    %v1536 = vshrl.u32 %v1535, 7
    %v1537 = vsub.s32 0, %v1536
    %v1538 = vrot.slane %v1533, %v1537
    %v1539 = vlaneseq
    %v1540 = vshrl.u32 %v1539, 7
    %v1541 = vsub.s32 1, %v1540
    %v1542 = vrot.slane %v1533, %v1541
    %v1545 = vsub.f32 %v1492, %v1538
    %v1546 = vsub.f32 %v1495, %v1538
    %v1547 = vsub.f32 %v1498, %v1542
    %v1548 = vsub.f32 %v1501, %v1542
    %v1549 = vmul.f32 %v1545, 1.442695
    %v1550 = vpow.pop %v1549
    %v1551 = vmul.f32 %v1546, 1.442695
    %v1552 = vpow.pop %v1551
    %v1553 = vmul.f32 %v1547, 1.442695
    %v1554 = vpow.pop %v1553
    %v1555 = vmul.f32 %v1548, 1.442695
    %v1556 = vpow.pop %v1555
    %1561 = vset.pattern.permute.xlu0 0
    %1562 = vperm.xlu0 %1561, %v1550
    %v1563 = vpop.permute.xlu0 %1562
    %1564 = vset.pattern.permute.xlu0 0
    %1565 = vperm.xlu0 %1564, %v1552
    %v1566 = vpop.permute.xlu0 %1565
    %1567 = vset.pattern.permute.xlu0 0
    %1568 = vperm.xlu0 %1567, %v1554
    %v1569 = vpop.permute.xlu0 %1568
    %1570 = vset.pattern.permute.xlu0 0
    %1571 = vperm.xlu0 %1570, %v1556
    %v1572 = vpop.permute.xlu0 %1571
    %v1573 = vlaneseq
    %v1574 = vshrl.u32 %v1573, 7
    %v1575 = vsub.s32 %v1507, %v1574
    %v1576 = vrot.slane %v1563, %v1575
    %v1577 = vlaneseq
    %v1578 = vshrl.u32 %v1577, 7
    %v1579 = vsub.s32 %v1512, %v1578
    %v1580 = vrot.slane %v1566, %v1579
    %v1581 = vsel %vm1517, %v1580, %v1576
    %v1582 = vlaneseq
    %v1583 = vshrl.u32 %v1582, 7
    %v1584 = vsub.s32 %v1507, %v1583
    %v1585 = vrot.slane %v1569, %v1584
    %v1586 = vlaneseq
    %v1587 = vshrl.u32 %v1586, 7
    %v1588 = vsub.s32 %v1512, %v1587
    %v1589 = vrot.slane %v1572, %v1588
    %v1590 = vsel %vm1517, %v1589, %v1585
    %v1591 = vsel %vm1379, %v1590, %v1581
    %v1593 = vsel %vm1530, %v1591, 0.0
    %1594 = vadd.xlane.f32.xlu0 %v1593
    %v1595 = vpop.xlane.xlu0 %1594
    %v1597 = vlaneseq
    %v1598 = vshrl.u32 %v1597, 7
    %v1599 = vsub.s32 0, %v1598
    %v1600 = vrot.slane %v1595, %v1599
    %v1601 = vlaneseq
    %v1602 = vshrl.u32 %v1601, 7
    %v1603 = vsub.s32 1, %v1602
    %v1604 = vrot.slane %v1595, %v1603
    %v1607 = vrcp.pop %v1600
    %v1608 = vmul.f32 %v1550, %v1607
    %v1609 = vmul.f32 %v1552, %v1607
    %v1610 = vrcp.pop %v1604
    %v1611 = vmul.f32 %v1554, %v1610
    %v1612 = vmul.f32 %v1556, %v1610
    %1614 = vset.pattern.permute.xlu0 0
    %1615 = vperm.xlu0 %1614, %v1608
    %v1616 = vpop.permute.xlu0 %1615
    %1619 = vset.pattern.permute.xlu0 0
    %1620 = vperm.xlu0 %1619, %v1609
    %v1621 = vpop.permute.xlu0 %1620
    %1624 = vset.pattern.permute.xlu0 0
    %1625 = vperm.xlu0 %1624, %v1611
    %v1626 = vpop.permute.xlu0 %1625
    %1629 = vset.pattern.permute.xlu0 0
    %1630 = vperm.xlu0 %1629, %v1612
    %v1631 = vpop.permute.xlu0 %1630
    %v1633 = vmul.f32 %v1616, %v1348
    %v1634 = vmul.f32 %v1621, %v1351
    %v1635 = vmul.f32 %v1626, %v1356
    %v1636 = vmul.f32 %v1631, %v1359
    %v1637 = vsel %vm963, %v1633, 0.0
    %v1638 = vsel %vm963, %v1634, 0.0
    %v1639 = vadd.f32 %v1637, %v1638
    %v1640 = vrot.slane %v1639, 4
    %v1641 = vadd.f32 %v1639, %v1640
    %v1642 = vrot.slane %v1641, 2
    %v1643 = vadd.f32 %v1641, %v1642
    %v1644 = vrot.slane %v1643, 1
    %v1645 = vadd.f32 %v1643, %v1644
    %v1646 = vsel %vm963, %v1635, 0.0
    %v1647 = vsel %vm963, %v1636, 0.0
    %v1648 = vadd.f32 %v1646, %v1647
    %v1649 = vrot.slane %v1648, 4
    %v1650 = vadd.f32 %v1648, %v1649
    %v1651 = vrot.slane %v1650, 2
    %v1652 = vadd.f32 %v1650, %v1651
    %v1653 = vrot.slane %v1652, 1
    %v1654 = vadd.f32 %v1652, %v1653
    %v1655 = vld [vmem:[%s2 + $0x8] sm:$0x1]
    %s1657 = vtos %v1655
    %v1658 = vstv %s1657
    %v1660 = vmul.f32 %v1658, %v1645
    %v1661 = vmul.f32 %v1658, %v1654
    %v1662 = vadd.f32 %v1660, %v1281
    %v1663 = vadd.f32 %v1661, %v1283
    %v1664 = vld [vmem:[#allocation2 + $0x98] sm:$0xf]
    %v1665 = vld [vmem:[#allocation2 + $0x9c] sm:$0xf]
    %v1666 = vld [vmem:[#allocation2 + $0xa0] sm:$0xf]
    %v1667 = vld [vmem:[#allocation2 + $0xa4] sm:$0xf]
    %v1668 = vpack.c.bf16 %v1662, %v1662
    %v1669 = vpack.c.bf16 %v1663, %v1663
    %v1670 = vld [vmem:[%s2 + $0x9] sm:$0x1]
    %v1671 = vlaneseq
    %v1672 = vshrl.u32 %v1671, 7
    %v1673 = vsub.s32 0, %v1672
    %v1674 = vrot.slane %v1670, %v1673
    %v1677 = vunpack.c.l.b16 %v1668
    %v1678 = vunpack.c.l.b16 %v1669
    %v1679 = vrot.slane %v1677, 7
    %v1680 = vrot.slane %v1678, 6
    %v1681 = vsel %vm1379, %v1680, %v1679
    %v1682 = vpack.c.b16 %v1681, %v1681
    %v1687 = vunpack.c.l.b16 %v1664
    %v1688 = vunpack.c.l.b16 %v1665
    %v1689 = vunpack.c.l.b16 %v1666
    %v1690 = vunpack.c.l.b16 %v1667
    %v1691 = vpack.c.b16 %v1688, %v1687
    %v1692 = vpack.c.b16 %v1690, %v1689
    %v1696 = vsel %vm963, %v1682, 0
    %1698 = vmatprep.subr.bf16.mxu0 0
    %1699 = vmatpush1.bf16.msra.mxu0 0
    %1700 = vmatprep.subr.bf16.mxu0 0
    %1701 = vmatpush1.bf16.msra.mxu0 0
    %1702 = vmatprep.subr.bf16.mxu0 0
    %1703 = vmatpush1.bf16.msra.mxu0 0
    %1704 = vmatprep.subr.bf16.mxu0 0
    %1705 = vmatpush1.bf16.msra.mxu0 0
    %1706 = vmatprep.subr.bf16.mxu0 0
    %1707 = vmatpush1.bf16.msra.mxu0 0
    %1708 = vmatprep.subr.bf16.mxu0 0
    %1709 = vmatpush1.bf16.msra.mxu0 0
    %1710 = vmatprep.subr.bf16.mxu0 0
    %1711 = vmatpush1.bf16.msra.mxu0 %v1692
    %1712 = vmatprep.subr.bf16.mxu0 0
    %1713 = vmatpush1.bf16.msra.mxu0 %v1691
    %1714 = vmatprep.subr.bf16.mxu0 0
    %1715 = vmatpush2.bf16.msra.mxu0 0
    %1716 = vmatprep.subr.bf16.mxu0 0
    %1717 = vmatpush2.bf16.msra.mxu0 0
    %1718 = vmatprep.subr.bf16.mxu0 0
    %1719 = vmatpush2.bf16.msra.mxu0 0
    %1720 = vmatprep.subr.bf16.mxu0 0
    %1721 = vmatpush2.bf16.msra.mxu0 0
    %1722 = vmatprep.subr.bf16.mxu0 0
    %1723 = vmatpush2.bf16.msra.mxu0 0
    %1724 = vmatprep.subr.bf16.mxu0 0
    %1725 = vmatpush2.bf16.msra.mxu0 0
    %1726 = vmatprep.subr.bf16.mxu0 0
    %1727 = vmatpush2.bf16.msra.mxu0 0
    %1728 = vmatprep.subr.bf16.mxu0 0
    %1729 = vmatpush2.bf16.msra.mxu0 0
    %1730 = vmatprep.mubr.bf16.mxu0 0
    %1731 = vmatmul.mubr.bf16.gmra.mxu0 %v1696
    %v1732 = vpop.f32.mrf.mxu0
    %v1733 = vadd.f32 %v1674, %v1732
    %v1734 = vpop.f32.mrf.mxu0
    %v1735 = vpop.f32.mrf.mxu0
    %v1736 = vpop.f32.mrf.mxu0
    %1737 = vdwg.mxu0
    %vm1738 = vcmp.gt.f32.partialorder %v1733, 0.0
    %v1739 = vmul.f32 %v1733, 0.1
    %v1740 = vsel %vm1738, %v1733, %v1739
    %v1741 = vld [vmem:[#allocation2 + $0xa8] sm:$0xf]
    %v1742 = vld [vmem:[#allocation2 + $0xac] sm:$0xf]
    %v1743 = vld [vmem:[#allocation2 + $0xb0] sm:$0xf]
    %v1744 = vld [vmem:[#allocation2 + $0xb4] sm:$0xf]
    %v1745 = vld [vmem:[#allocation2 + $0xb8] sm:$0xf]
    %v1746 = vld [vmem:[#allocation2 + $0xbc] sm:$0xf]
    %v1747 = vld [vmem:[#allocation2 + $0xc0] sm:$0xf]
    %v1748 = vld [vmem:[#allocation2 + $0xc4] sm:$0xf]
    %v1749 = vld [vmem:[#allocation2 + $0xc8] sm:$0xf]
    %v1750 = vld [vmem:[#allocation2 + $0xcc] sm:$0xf]
    %v1751 = vld [vmem:[#allocation2 + $0xd0] sm:$0xf]
    %v1752 = vld [vmem:[#allocation2 + $0xd4] sm:$0xf]
    %v1753 = vld [vmem:[#allocation2 + $0xd8] sm:$0xf]
    %v1754 = vld [vmem:[#allocation2 + $0xdc] sm:$0xf]
    %v1755 = vld [vmem:[#allocation2 + $0xe0] sm:$0xf]
    %v1756 = vld [vmem:[#allocation2 + $0xe4] sm:$0xf]
    %v1757 = vpack.c.bf16 %v1740, %v1740
    %v1758 = vld [vmem:[%s2 + $0xa] sm:$0x1]
    %v1759 = vlaneseq
    %v1760 = vshrl.u32 %v1759, 7
    %v1761 = vsub.s32 0, %v1760
    %v1762 = vrot.slane %v1758, %v1761
    %v1779 = vunpack.c.l.b16 %v1741
    %v1780 = vunpack.c.l.b16 %v1742
    %v1781 = vunpack.c.l.b16 %v1743
    %v1782 = vunpack.c.l.b16 %v1744
    %v1783 = vunpack.c.l.b16 %v1745
    %v1784 = vunpack.c.l.b16 %v1746
    %v1785 = vunpack.c.l.b16 %v1747
    %v1786 = vunpack.c.l.b16 %v1748
    %v1787 = vunpack.c.l.b16 %v1749
    %v1788 = vunpack.c.l.b16 %v1750
    %v1789 = vunpack.c.l.b16 %v1751
    %v1790 = vunpack.c.l.b16 %v1752
    %v1791 = vunpack.c.l.b16 %v1753
    %v1792 = vunpack.c.l.b16 %v1754
    %v1793 = vunpack.c.l.b16 %v1755
    %v1794 = vunpack.c.l.b16 %v1756
    %v1795 = vpack.c.b16 %v1780, %v1779
    %v1796 = vpack.c.b16 %v1782, %v1781
    %v1797 = vpack.c.b16 %v1784, %v1783
    %v1798 = vpack.c.b16 %v1786, %v1785
    %v1799 = vpack.c.b16 %v1788, %v1787
    %v1800 = vpack.c.b16 %v1790, %v1789
    %v1801 = vpack.c.b16 %v1792, %v1791
    %v1802 = vpack.c.b16 %v1794, %v1793
    %1811 = vmatprep.subr.bf16.mxu0 0
    %1812 = vmatpush1.bf16.msra.mxu0 %v1802
    %1813 = vmatprep.subr.bf16.mxu0 0
    %1814 = vmatpush1.bf16.msra.mxu0 %v1801
    %1815 = vmatprep.subr.bf16.mxu0 0
    %1816 = vmatpush1.bf16.msra.mxu0 %v1800
    %1817 = vmatprep.subr.bf16.mxu0 0
    %1818 = vmatpush1.bf16.msra.mxu0 %v1799
    %1819 = vmatprep.subr.bf16.mxu0 0
    %1820 = vmatpush1.bf16.msra.mxu0 %v1798
    %1821 = vmatprep.subr.bf16.mxu0 0
    %1822 = vmatpush1.bf16.msra.mxu0 %v1797
    %1823 = vmatprep.subr.bf16.mxu0 0
    %1824 = vmatpush1.bf16.msra.mxu0 %v1796
    %1825 = vmatprep.subr.bf16.mxu0 0
    %1826 = vmatpush1.bf16.msra.mxu0 %v1795
    %1827 = vmatprep.subr.bf16.mxu0 0
    %1828 = vmatpush2.bf16.msra.mxu0 0
    %1829 = vmatprep.subr.bf16.mxu0 0
    %1830 = vmatpush2.bf16.msra.mxu0 0
    %1831 = vmatprep.subr.bf16.mxu0 0
    %1832 = vmatpush2.bf16.msra.mxu0 0
    %1833 = vmatprep.subr.bf16.mxu0 0
    %1834 = vmatpush2.bf16.msra.mxu0 0
    %1835 = vmatprep.subr.bf16.mxu0 0
    %1836 = vmatpush2.bf16.msra.mxu0 0
    %1837 = vmatprep.subr.bf16.mxu0 0
    %1838 = vmatpush2.bf16.msra.mxu0 0
    %1839 = vmatprep.subr.bf16.mxu0 0
    %1840 = vmatpush2.bf16.msra.mxu0 0
    %1841 = vmatprep.subr.bf16.mxu0 0
    %1842 = vmatpush2.bf16.msra.mxu0 0
    %1843 = vmatprep.mubr.bf16.mxu0 0
    %1844 = vmatmul.mubr.bf16.gmra.mxu0 %v1757
    %v1845 = vpop.f32.mrf.mxu0
    %v1846 = vadd.f32 %v1762, %v1845
    %v1847 = vpop.f32.mrf.mxu0
    %v1848 = vpop.f32.mrf.mxu0
    %v1849 = vpop.f32.mrf.mxu0
    %1850 = vdwg.mxu0
    %vm1851 = vcmp.gt.f32.partialorder %v1846, 0.0
    %v1852 = vmul.f32 %v1846, 0.1
    %v1853 = vsel %vm1851, %v1846, %v1852
    %v1854 = vld [vmem:[#allocation2 + $0xe8] sm:$0xf]
    %v1855 = vld [vmem:[#allocation2 + $0xec] sm:$0xf]
    %v1856 = vld [vmem:[#allocation2 + $0xf0] sm:$0xf]
    %v1857 = vld [vmem:[#allocation2 + $0xf4] sm:$0xf]
    %v1858 = vld [vmem:[#allocation2 + $0xf8] sm:$0xf]
    %v1859 = vld [vmem:[#allocation2 + $0xfc] sm:$0xf]
    %v1860 = vld [vmem:[#allocation2 + $0x100] sm:$0xf]
    %v1861 = vld [vmem:[#allocation2 + $0x104] sm:$0xf]
    %v1862 = vpack.c.bf16 %v1853, %v1853
    %v1863 = vld [vmem:[%s2 + $0xb] sm:$0x1]
    %v1864 = vlaneseq
    %v1865 = vshrl.u32 %v1864, 7
    %v1866 = vsub.s32 0, %v1865
    %v1867 = vrot.slane %v1863, %v1866
    %v1876 = vunpack.c.l.b16 %v1854
    %v1877 = vunpack.c.l.b16 %v1855
    %v1878 = vunpack.c.l.b16 %v1856
    %v1879 = vunpack.c.l.b16 %v1857
    %v1880 = vunpack.c.l.b16 %v1858
    %v1881 = vunpack.c.l.b16 %v1859
    %v1882 = vunpack.c.l.b16 %v1860
    %v1883 = vunpack.c.l.b16 %v1861
    %v1884 = vpack.c.b16 %v1877, %v1876
    %v1885 = vpack.c.b16 %v1879, %v1878
    %v1886 = vpack.c.b16 %v1881, %v1880
    %v1887 = vpack.c.b16 %v1883, %v1882
    %vm1892 = vcmask 523264
    %v1894 = vsel %vm1892, %v1862, 0
    %1896 = vmatprep.subr.bf16.mxu0 0
    %1897 = vmatpush1.bf16.msra.mxu0 0
    %1898 = vmatprep.subr.bf16.mxu0 0
    %1899 = vmatpush1.bf16.msra.mxu0 0
    %1900 = vmatprep.subr.bf16.mxu0 0
    %1901 = vmatpush1.bf16.msra.mxu0 0
    %1902 = vmatprep.subr.bf16.mxu0 0
    %1903 = vmatpush1.bf16.msra.mxu0 0
    %1904 = vmatprep.subr.bf16.mxu0 0
    %1905 = vmatpush1.bf16.msra.mxu0 %v1887
    %1906 = vmatprep.subr.bf16.mxu0 0
    %1907 = vmatpush1.bf16.msra.mxu0 %v1886
    %1908 = vmatprep.subr.bf16.mxu0 0
    %1909 = vmatpush1.bf16.msra.mxu0 %v1885
    %1910 = vmatprep.subr.bf16.mxu0 0
    %1911 = vmatpush1.bf16.msra.mxu0 %v1884
    %1912 = vmatprep.subr.bf16.mxu0 0
    %1913 = vmatpush2.bf16.msra.mxu0 0
    %1914 = vmatprep.subr.bf16.mxu0 0
    %1915 = vmatpush2.bf16.msra.mxu0 0
    %1916 = vmatprep.subr.bf16.mxu0 0
    %1917 = vmatpush2.bf16.msra.mxu0 0
    %1918 = vmatprep.subr.bf16.mxu0 0
    %1919 = vmatpush2.bf16.msra.mxu0 0
    %1920 = vmatprep.subr.bf16.mxu0 0
    %1921 = vmatpush2.bf16.msra.mxu0 0
    %1922 = vmatprep.subr.bf16.mxu0 0
    %1923 = vmatpush2.bf16.msra.mxu0 0
    %1924 = vmatprep.subr.bf16.mxu0 0
    %1925 = vmatpush2.bf16.msra.mxu0 0
    %1926 = vmatprep.subr.bf16.mxu0 0
    %1927 = vmatpush2.bf16.msra.mxu0 0
    %1928 = vmatprep.mubr.bf16.mxu0 0
    %1929 = vmatmul.mubr.bf16.gmra.mxu0 %v1894
    %v1930 = vpop.f32.mrf.mxu0
    %v1931 = vadd.f32 %v1867, %v1930
    %v1932 = vpop.f32.mrf.mxu0
    %v1933 = vpop.f32.mrf.mxu0
    %v1934 = vpop.f32.mrf.mxu0
    %1935 = vdwg.mxu0
    %vm1936 = vcmp.gt.f32.partialorder %v1931, 0.0
    %v1937 = vmul.f32 %v1931, 0.1
    %v1938 = vsel %vm1936, %v1931, %v1937
    %v1939 = vld [vmem:[#allocation2 + $0x108] sm:$0xf]
    %v1940 = vld [vmem:[#allocation2 + $0x10c] sm:$0xf]
    %v1941 = vld [vmem:[#allocation2 + $0x110] sm:$0xf]
    %v1942 = vld [vmem:[#allocation2 + $0x114] sm:$0xf]
    %v1943 = vpack.c.bf16 %v1938, %v1938
    %v1944 = vld [vmem:[%s2 + $0xc] sm:$0x1]
    %v1945 = vlaneseq
    %v1946 = vshrl.u32 %v1945, 7
    %v1947 = vsub.s32 0, %v1946
    %v1948 = vrot.slane %v1944, %v1947
    %v1953 = vunpack.c.l.b16 %v1939
    %v1954 = vunpack.c.l.b16 %v1940
    %v1955 = vunpack.c.l.b16 %v1941
    %v1956 = vunpack.c.l.b16 %v1942
    %v1957 = vpack.c.b16 %v1954, %v1953
    %v1958 = vpack.c.b16 %v1956, %v1955
    %v1962 = vsel %vm963, %v1943, 0
    %1964 = vmatprep.subr.bf16.mxu0 0
    %1965 = vmatpush1.bf16.msra.mxu0 0
    %1966 = vmatprep.subr.bf16.mxu0 0
    %1967 = vmatpush1.bf16.msra.mxu0 0
    %1968 = vmatprep.subr.bf16.mxu0 0
    %1969 = vmatpush1.bf16.msra.mxu0 0
    %1970 = vmatprep.subr.bf16.mxu0 0
    %1971 = vmatpush1.bf16.msra.mxu0 0
    %1972 = vmatprep.subr.bf16.mxu0 0
    %1973 = vmatpush1.bf16.msra.mxu0 0
    %1974 = vmatprep.subr.bf16.mxu0 0
    %1975 = vmatpush1.bf16.msra.mxu0 0
    %1976 = vmatprep.subr.bf16.mxu0 0
    %1977 = vmatpush1.bf16.msra.mxu0 %v1958
    %1978 = vmatprep.subr.bf16.mxu0 0
    %1979 = vmatpush1.bf16.msra.mxu0 %v1957
    %1980 = vmatprep.subr.bf16.mxu0 0
    %1981 = vmatpush2.bf16.msra.mxu0 0
    %1982 = vmatprep.subr.bf16.mxu0 0
    %1983 = vmatpush2.bf16.msra.mxu0 0
    %1984 = vmatprep.subr.bf16.mxu0 0
    %1985 = vmatpush2.bf16.msra.mxu0 0
    %1986 = vmatprep.subr.bf16.mxu0 0
    %1987 = vmatpush2.bf16.msra.mxu0 0
    %1988 = vmatprep.subr.bf16.mxu0 0
    %1989 = vmatpush2.bf16.msra.mxu0 0
    %1990 = vmatprep.subr.bf16.mxu0 0
    %1991 = vmatpush2.bf16.msra.mxu0 0
    %1992 = vmatprep.subr.bf16.mxu0 0
    %1993 = vmatpush2.bf16.msra.mxu0 0
    %1994 = vmatprep.subr.bf16.mxu0 0
    %1995 = vmatpush2.bf16.msra.mxu0 0
    %1996 = vmatprep.mubr.bf16.mxu0 0
    %1997 = vmatmul.mubr.bf16.gmra.mxu0 %v1962
    %v1998 = vpop.f32.mrf.mxu0
    %v1999 = vadd.f32 %v1948, %v1998
    %v2000 = vpop.f32.mrf.mxu0
    %v2001 = vpop.f32.mrf.mxu0
    %v2002 = vpop.f32.mrf.mxu0
    %2003 = vdwg.mxu0
    %vm2004 = vcmask 1024
    %2005 = vst.msk [vmem:[%s3] sm:$0x3] %vm2004, %v1999
    // Predicated region
    $region18: #{fwd.1} parent=1 // pred_check
      _
    $region19: #{fwd.1} parent=1 // pred_check_branch
      %2007 = sbr.rel (0) target = $region21
    $region20: #{fwd.1} parent=1 // pred_region
      _
    $region21: #{fwd.1} parent=1 // pred_fallthru
      _
    // Predicated region
    $region22: #{fwd.1} parent=1 // pred_check
      _
    $region23: #{fwd.1} parent=1 // pred_check_branch
      %2009 = sbr.rel (0) target = $region25
    $region24: #{fwd.1} parent=1 // pred_region
      _
    $region25: #{fwd.1} parent=1 // pred_fallthru
      _
    %2010 = vsyncpa [#allocation3], 1

</llo_original>
